<compile_context>
chip_gen: v6e
topology: v6e:2x2x1
jax: 0.10.0
libtpu: 0.0.40
codegen_flags: <defaults>
</compile_context>

<pallas_src>
import functools

import jax
import jax.numpy as jnp
from jax import lax
from jax.experimental import pallas as pl
from jax.experimental.pallas import tpu as pltpu

_EPS = 1e-5
_VMEM_LIMIT = 32 << 20


def _round_up(x, m):
    return (x + m - 1) // m * m


def _row_tile(m, c, target_bytes=4 << 20):
    """Largest row tile (multiple of 8, dividing m) with ~target_bytes bf16/block."""
    t = (target_bytes // max(1, c * 2)) // 8 * 8
    t = max(8, min(t, 4096, m))
    while m % t:
        t -= 8
    return t


def _div_tile8(n, max_rows):
    """Largest multiple-of-8 divisor of n (n % 8 == 0) not exceeding max_rows."""
    t = min(n, max(8, (max_rows // 8) * 8))
    while n % t:
        t -= 8
    return t


def _chan_tile(c):
    return c if c <= 512 else 512


def _hw_tile(hw, b, c, target_bytes=4 << 20):
    t = (target_bytes // max(1, b * c * 2)) // 8 * 8
    t = max(8, min(t, hw))
    if t >= hw or hw % 8:
        return hw
    while hw % t:
        t -= 8
    return t


def _cparams(sems):
    return pltpu.CompilerParams(dimension_semantics=sems,
                                vmem_limit_bytes=_VMEM_LIMIT)


# ---------------------------------------------------------------------------
# Tiled MXU matmul with fused BN-statistics epilogue.
# Grid = (N_tiles, M_tiles, K_tiles); weight block is invariant across the
# inner M loop when K fits one block, so it is DMA'd once per N tile.
# ---------------------------------------------------------------------------
def _matmul_bn_kernel(a_ref, b_ref, o_ref, s_ref, q_ref,
                      acc_ref, sacc_ref, qacc_ref):
    i = pl.program_id(1)
    k = pl.program_id(2)
    last_k = k == pl.num_programs(2) - 1

    @pl.when(k == 0)
    def _():
        acc_ref[...] = jnp.zeros_like(acc_ref)

    acc_ref[...] += jnp.dot(a_ref[...], b_ref[...],
                            preferred_element_type=jnp.float32)

    @pl.when(jnp.logical_and(last_k, i == 0))
    def _():
        sacc_ref[...] = jnp.zeros_like(sacc_ref)
        qacc_ref[...] = jnp.zeros_like(qacc_ref)

    @pl.when(last_k)
    def _():
        acc = acc_ref[...]
        o_ref[...] = acc.astype(o_ref.dtype)
        sacc_ref[...] += jnp.sum(acc, axis=0, keepdims=True)
        qacc_ref[...] += jnp.sum(acc * acc, axis=0, keepdims=True)

    @pl.when(jnp.logical_and(last_k, i == pl.num_programs(1) - 1))
    def _():
        s_ref[...] = sacc_ref[...]
        q_ref[...] = qacc_ref[...]


def pallas_matmul_bn(a, b):
    """a: (M, K) bf16, b: (K, N) bf16 -> (out (M,N) bf16, sum (1,N), sumsq (1,N))."""
    M, K = a.shape
    _, N = b.shape

    # K handling: pad to a lane-aligned width only when K is ragged (stem 147).
    if K % 8 != 0:
        Kp = _round_up(K, 128)
        a = jnp.pad(a, ((0, 0), (0, Kp - K)))
        b = jnp.pad(b, ((0, Kp - K), (0, 0)))
    else:
        Kp = K
    if Kp <= 2048:
        TK = Kp                      # single K block -> weight reuse across M
    else:
        TK = next((c for c in (2048, 1024, 512, 384, 256, 128) if Kp % c == 0),
                  Kp)

    # N tiling: small / ragged N uses one full-width block.
    if N % 128 == 0:
        TN = next(c for c in (512, 384, 256, 128) if N % c == 0)
        Np = N
    elif N <= 512:
        TN = Np = N
    else:
        Np = _round_up(N, 128)
        b = jnp.pad(b, ((0, 0), (0, Np - N)))
        TN = next(c for c in (512, 384, 256, 128) if Np % c == 0)

    TM = min(256, _round_up(M, 8))
    Mp = _round_up(M, TM)
    if Mp != M:
        a = jnp.pad(a, ((0, Mp - M), (0, 0)))      # zero rows don't bias stats

    out, s, q = pl.pallas_call(
        _matmul_bn_kernel,
        out_shape=(jax.ShapeDtypeStruct((Mp, Np), jnp.bfloat16),
                   jax.ShapeDtypeStruct((1, Np), jnp.float32),
                   jax.ShapeDtypeStruct((1, Np), jnp.float32)),
        grid_spec=pltpu.PrefetchScalarGridSpec(
            num_scalar_prefetch=0,
            grid=(Np // TN, Mp // TM, Kp // TK),
            in_specs=[pl.BlockSpec((TM, TK), lambda j, i, k: (i, k)),
                      pl.BlockSpec((TK, TN), lambda j, i, k: (k, j))],
            out_specs=(pl.BlockSpec((TM, TN), lambda j, i, k: (i, j)),
                       pl.BlockSpec((1, TN), lambda j, i, k: (0, j)),
                       pl.BlockSpec((1, TN), lambda j, i, k: (0, j))),
            scratch_shapes=[pltpu.VMEM((TM, TN), jnp.float32),
                            pltpu.VMEM((1, TN), jnp.float32),
                            pltpu.VMEM((1, TN), jnp.float32)]),
        compiler_params=_cparams(("parallel", "arbitrary", "arbitrary")),
    )(a, b)
    if Mp != M or Np != N:
        out = out[:M, :N]
        s = s[:, :N]
        q = q[:, :N]
    return out, s, q


# ---------------------------------------------------------------------------
# Conv via im2col + matmul (1x1 convs, 7x7 stem, strided / small-width 3x3).
# Always returns fused per-channel BN statistics alongside the bf16 output.
# ---------------------------------------------------------------------------
@functools.partial(jax.jit, static_argnames=("stride", "dilation", "padding"))
def conv_matmul(x, w, *, stride=1, dilation=1, padding=0):
    B, H, W, Cin = x.shape
    KH, KW, _, Cout = w.shape
    Ho = (H + 2 * padding - dilation * (KH - 1) - 1) // stride + 1
    Wo = (W + 2 * padding - dilation * (KW - 1) - 1) // stride + 1
    if KH == 1 and KW == 1 and padding == 0:
        patches = x[:, ::stride, ::stride, :].reshape(B * Ho * Wo, Cin)
    else:
        xp = jnp.pad(x, ((0, 0), (padding, padding), (padding, padding),
                         (0, 0)))
        cols = []
        for i in range(KH):
            for j in range(KW):
                hi, wj = i * dilation, j * dilation
                cols.append(xp[:, hi:hi + stride * (Ho - 1) + 1:stride,
                               wj:wj + stride * (Wo - 1) + 1:stride, :])
        patches = jnp.concatenate(cols, axis=-1).reshape(B * Ho * Wo,
                                                         KH * KW * Cin)
    out, s, q = pallas_matmul_bn(patches, w.reshape(KH * KW * Cin, Cout))
    return out.reshape(B, Ho, Wo, Cout), s, q


# ---------------------------------------------------------------------------
# Direct (no-im2col) dilated 3x3 stride-1 conv with output-row tiling.
# The padded image is DMA'd once per batch and stays resident across the row
# and Cout grid axes; the 9 taps accumulate into a small VMEM scratch.
# ---------------------------------------------------------------------------
def _conv3x3_kernel(x_ref, w_ref, o_ref, acc_ref, *, dilation, th, wo, cin,
                    tco):
    row0 = pl.program_id(1) * th
    acc_ref[...] = jnp.zeros_like(acc_ref)
    for i in range(3):
        for j in range(3):
            win = x_ref[:, pl.ds(row0 + i * dilation, th),
                        pl.ds(j * dilation, wo), :]
            acc_ref[...] += jnp.dot(win.reshape(th * wo, cin),
                                    w_ref[i, j, :, :],
                                    preferred_element_type=jnp.float32)
    o_ref[...] = acc_ref[...].reshape(1, th, wo, tco).astype(o_ref.dtype)


@functools.partial(jax.jit, static_argnames=("dilation",))
def conv3x3_direct(x, w, *, dilation=1):
    B, H, W, Cin = x.shape
    Cout = w.shape[-1]
    pad = dilation
    # TODO(synk): handle the halo in-kernel (masked edges) instead of jnp.pad.
    xp = jnp.pad(x, ((0, 0), (pad, pad), (pad, pad), (0, 0)))
    Hp, Wp = H + 2 * pad, W + 2 * pad
    tco = Cout if Cout <= 256 else 256
    # Row tile keeps the per-step f32 accumulator around <= 1 MiB.
    cap = max(1, (1 << 20) // max(1, W * max(Cin, tco) * 4))
    th = min(H, cap)
    while H % th:
        th -= 1
    kern = functools.partial(_conv3x3_kernel, dilation=dilation, th=th, wo=W,
                             cin=Cin, tco=tco)
    return pl.pallas_call(
        kern,
        out_shape=jax.ShapeDtypeStruct((B, H, W, Cout), jnp.bfloat16),
        grid_spec=pltpu.PrefetchScalarGridSpec(
            num_scalar_prefetch=0,
            grid=(B, H // th, Cout // tco),
            in_specs=[pl.BlockSpec((1, Hp, Wp, Cin),
                                   lambda b, r, co: (b, 0, 0, 0)),
                      pl.BlockSpec((3, 3, Cin, tco),
                                   lambda b, r, co: (0, 0, 0, co))],
            out_specs=pl.BlockSpec((1, th, W, tco),
                                   lambda b, r, co: (b, r, 0, co)),
            scratch_shapes=[pltpu.VMEM((th * W, tco), jnp.float32)]),
        compiler_params=_cparams(("parallel", "arbitrary", "arbitrary")),
    )(xp, w)


# ---------------------------------------------------------------------------
# BatchNorm (training-mode batch statistics, gamma=1 / beta=0).
# Stats usually come fused from the conv epilogue; a standalone stats kernel
# remains for the direct-3x3 path.  Apply kernels read/write bf16.
# ---------------------------------------------------------------------------
def _bn_coeffs(s, q, count):
    mean = s / count
    var = jnp.maximum(q / count - mean * mean, 0.0)
    scale = lax.rsqrt(var + _EPS)
    return scale, -mean * scale


def _bn_stats_kernel(x_ref, s_ref, q_ref, acc_s, acc_q):
    @pl.when(pl.program_id(1) == 0)
    def _():
        acc_s[...] = jnp.zeros_like(acc_s)
        acc_q[...] = jnp.zeros_like(acc_q)

    x = x_ref[...].astype(jnp.float32)
    acc_s[...] += jnp.sum(x, axis=0, keepdims=True)
    acc_q[...] += jnp.sum(x * x, axis=0, keepdims=True)

    @pl.when(pl.program_id(1) == pl.num_programs(1) - 1)
    def _():
        s_ref[...] = acc_s[...]
        q_ref[...] = acc_q[...]


@jax.jit
def bn_stats(x):
    B, H, W, C = x.shape
    M = B * H * W
    Mp = _round_up(M, 8)
    x2 = x.reshape(M, C)
    if Mp != M:
        x2 = jnp.pad(x2, ((0, Mp - M), (0, 0)))     # zero rows don't bias sums
    tr = _row_tile(Mp, C)
    tc = _chan_tile(C)
    return pl.pallas_call(
        _bn_stats_kernel,
        out_shape=(jax.ShapeDtypeStruct((1, C), jnp.float32),
                   jax.ShapeDtypeStruct((1, C), jnp.float32)),
        grid_spec=pltpu.PrefetchScalarGridSpec(
            num_scalar_prefetch=0,
            grid=(C // tc, Mp // tr),
            in_specs=[pl.BlockSpec((tr, tc), lambda ci, ri: (ri, ci))],
            out_specs=(pl.BlockSpec((1, tc), lambda ci, ri: (0, ci)),
                       pl.BlockSpec((1, tc), lambda ci, ri: (0, ci))),
            scratch_shapes=[pltpu.VMEM((1, tc), jnp.float32),
                            pltpu.VMEM((1, tc), jnp.float32)]),
        compiler_params=_cparams(("parallel", "arbitrary")),
    )(x2)


def _bn_apply_kernel(x_ref, sc_ref, sh_ref, o_ref, *, relu):
    y = x_ref[...].astype(jnp.float32) * sc_ref[...] + sh_ref[...]
    if relu:
        y = jnp.maximum(y, 0.0)
    o_ref[...] = y.astype(o_ref.dtype)


@functools.partial(jax.jit, static_argnames=("relu",))
def bn_apply(x, s, q, relu=True):
    B, H, W, C = x.shape
    M = B * H * W
    scale, shift = _bn_coeffs(s, q, float(M))
    Mp = _round_up(M, 8)
    x2 = x.reshape(M, C)
    if Mp != M:
        x2 = jnp.pad(x2, ((0, Mp - M), (0, 0)))
    tr = _row_tile(Mp, C)
    tc = _chan_tile(C)
    kern = functools.partial(_bn_apply_kernel, relu=relu)
    y = pl.pallas_call(
        kern,
        out_shape=jax.ShapeDtypeStruct((Mp, C), jnp.bfloat16),
        grid_spec=pltpu.PrefetchScalarGridSpec(
            num_scalar_prefetch=0,
            grid=(C // tc, Mp // tr),
            in_specs=[pl.BlockSpec((tr, tc), lambda ci, ri: (ri, ci)),
                      pl.BlockSpec((1, tc), lambda ci, ri: (0, ci)),
                      pl.BlockSpec((1, tc), lambda ci, ri: (0, ci))],
            out_specs=pl.BlockSpec((tr, tc), lambda ci, ri: (ri, ci))),
        compiler_params=_cparams(("parallel", "parallel")),
    )(x2, scale, shift)
    return y[:M].reshape(B, H, W, C)


def _bn_add_relu_pool_kernel(x_ref, sc_ref, sh_ref, r_ref, o_ref, ps_ref,
                             acc_ref, *, tpb):
    t = pl.program_id(1) % tpb

    @pl.when(t == 0)
    def _():
        acc_ref[...] = jnp.zeros_like(acc_ref)

    y = (x_ref[...].astype(jnp.float32) * sc_ref[...] + sh_ref[...]
         + r_ref[...].astype(jnp.float32))
    y = jnp.maximum(y, 0.0)
    o_ref[...] = y.astype(o_ref.dtype)
    acc_ref[...] += jnp.sum(y, axis=0, keepdims=True)

    @pl.when(t == tpb - 1)
    def _():
        ps_ref[...] = acc_ref[...].reshape(ps_ref.shape)


def _bn_add_relu_kernel(x_ref, sc_ref, sh_ref, r_ref, o_ref):
    y = (x_ref[...].astype(jnp.float32) * sc_ref[...] + sh_ref[...]
         + r_ref[...].astype(jnp.float32))
    o_ref[...] = jnp.maximum(y, 0.0).astype(o_ref.dtype)


@jax.jit
def bn_add_relu_pool(x, s, q, residual):
    """bn3 + residual add + ReLU fused with the SE global-average-pool sums."""
    B, H, W, C = x.shape
    HW = H * W
    M = B * HW
    scale, shift = _bn_coeffs(s, q, float(M))
    x2 = x.reshape(M, C)
    r2 = residual.reshape(M, C)
    tc = _chan_tile(C)

    if HW % 8 == 0:
        tr = _div_tile8(HW, (2 << 20) // max(1, tc * 2))
        tpb = HW // tr
        kern = functools.partial(_bn_add_relu_pool_kernel, tpb=tpb)
        y, psum = pl.pallas_call(
            kern,
            out_shape=(jax.ShapeDtypeStruct((M, C), jnp.bfloat16),
                       jax.ShapeDtypeStruct((B, 1, C), jnp.float32)),
            grid_spec=pltpu.PrefetchScalarGridSpec(
                num_scalar_prefetch=0,
                grid=(C // tc, M // tr),
                in_specs=[pl.BlockSpec((tr, tc), lambda ci, ri: (ri, ci)),
                          pl.BlockSpec((1, tc), lambda ci, ri: (0, ci)),
                          pl.BlockSpec((1, tc), lambda ci, ri: (0, ci)),
                          pl.BlockSpec((tr, tc), lambda ci, ri: (ri, ci))],
                out_specs=(pl.BlockSpec((tr, tc), lambda ci, ri: (ri, ci)),
                           pl.BlockSpec((1, 1, tc),
                                        lambda ci, ri: (ri // tpb, 0, ci))),
                scratch_shapes=[pltpu.VMEM((1, tc), jnp.float32)]),
            compiler_params=_cparams(("parallel", "arbitrary")),
        )(x2, scale, shift, r2)
        return y.reshape(B, H, W, C), psum.reshape(B, C) / float(HW)

    # Fallback when HW isn't sublane-aligned: unfused apply + separate pool.
    Mp = _round_up(M, 8)
    xp2, rp2 = x2, r2
    if Mp != M:
        xp2 = jnp.pad(x2, ((0, Mp - M), (0, 0)))
        rp2 = jnp.pad(r2, ((0, Mp - M), (0, 0)))
    tr = _row_tile(Mp, C)
    y = pl.pallas_call(
        _bn_add_relu_kernel,
        out_shape=jax.ShapeDtypeStruct((Mp, C), jnp.bfloat16),
        grid_spec=pltpu.PrefetchScalarGridSpec(
            num_scalar_prefetch=0,
            grid=(C // tc, Mp // tr),
            in_specs=[pl.BlockSpec((tr, tc), lambda ci, ri: (ri, ci)),
                      pl.BlockSpec((1, tc), lambda ci, ri: (0, ci)),
                      pl.BlockSpec((1, tc), lambda ci, ri: (0, ci)),
                      pl.BlockSpec((tr, tc), lambda ci, ri: (ri, ci))],
            out_specs=pl.BlockSpec((tr, tc), lambda ci, ri: (ri, ci))),
        compiler_params=_cparams(("parallel", "parallel")),
    )(xp2, scale, shift, rp2)[:M]
    y4 = y.reshape(B, H, W, C)
    return y4, _pool_mean(y4)


# ---------------------------------------------------------------------------
# MaxPool 3x3 / stride 2 / pad 1 — windowed max tree in jnp glue.
# TODO(synk): could be a dedicated tiled Pallas kernel.
# ---------------------------------------------------------------------------
@jax.jit
def maxpool_3x3_s2(x):
    B, H, W, C = x.shape
    Ho = (H + 2 - 3) // 2 + 1
    Wo = (W + 2 - 3) // 2 + 1
    xp = jnp.pad(x, ((0, 0), (1, 1), (1, 1), (0, 0)),
                 constant_values=-jnp.inf)
    out = None
    for i in range(3):
        for j in range(3):
            win = xp[:, i:i + 2 * (Ho - 1) + 1:2, j:j + 2 * (Wo - 1) + 1:2, :]
            out = win if out is None else jnp.maximum(out, win)
    return out


# ---------------------------------------------------------------------------
# Global average pool (tiled Pallas reduction) — used by the head (and the
# rare non-aligned SE fallback).
# ---------------------------------------------------------------------------
def _pool_sum_kernel(x_ref, o_ref, acc_ref):
    @pl.when(pl.program_id(1) == 0)
    def _():
        acc_ref[...] = jnp.zeros_like(acc_ref)

    acc_ref[...] += jnp.sum(x_ref[...].astype(jnp.float32), axis=1,
                            keepdims=True)

    @pl.when(pl.program_id(1) == pl.num_programs(1) - 1)
    def _():
        o_ref[...] = acc_ref[...]


def _pool_mean(x):
    B, H, W, C = x.shape
    HW = H * W
    x3 = x.reshape(B, HW, C)
    thw = _hw_tile(HW, B, C)
    tc = _chan_tile(C)
    pooled = pl.pallas_call(
        _pool_sum_kernel,
        out_shape=jax.ShapeDtypeStruct((B, 1, C), jnp.float32),
        grid_spec=pltpu.PrefetchScalarGridSpec(
            num_scalar_prefetch=0,
            grid=(C // tc, HW // thw),
            in_specs=[pl.BlockSpec((B, thw, tc), lambda ci, ri: (0, ri, ci))],
            out_specs=pl.BlockSpec((B, 1, tc), lambda ci, ri: (0, 0, ci)),
            scratch_shapes=[pltpu.VMEM((B, 1, tc), jnp.float32)]),
        compiler_params=_cparams(("parallel", "arbitrary")),
    )(x3)
    return pooled.reshape(B, C) / float(HW)


# ---------------------------------------------------------------------------
# Squeeze-and-Excitation: gate MLP + channel-wise gating (pool already fused
# into the preceding bn_add_relu_pool kernel).
# ---------------------------------------------------------------------------
def _se_fc_kernel(p_ref, w1_ref, w2_ref, o_ref):
    p = p_ref[...].astype(jnp.bfloat16)
    h = jnp.maximum(jnp.dot(p, w1_ref[...],
                            preferred_element_type=jnp.float32), 0.0)
    z = jnp.dot(h.astype(jnp.bfloat16), w2_ref[...],
                preferred_element_type=jnp.float32)
    o_ref[...] = 1.0 / (1.0 + jnp.exp(-z))


def _se_apply_kernel(x_ref, g_ref, o_ref):
    o_ref[...] = (x_ref[...].astype(jnp.float32) * g_ref[...]).astype(
        o_ref.dtype)


@jax.jit
def se_gate_apply(x, pooled, w1, w2):
    B, H, W, C = x.shape
    HW = H * W
    gates = pl.pallas_call(
        _se_fc_kernel,
        out_shape=jax.ShapeDtypeStruct((B, C), jnp.float32),
    )(pooled, w1, w2)
    x3 = x.reshape(B, HW, C)
    thw = _hw_tile(HW, B, C)
    tc = _chan_tile(C)
    y = pl.pallas_call(
        _se_apply_kernel,
        out_shape=jax.ShapeDtypeStruct((B, HW, C), jnp.bfloat16),
        grid_spec=pltpu.PrefetchScalarGridSpec(
            num_scalar_prefetch=0,
            grid=(C // tc, HW // thw),
            in_specs=[pl.BlockSpec((B, thw, tc), lambda ci, ri: (0, ri, ci)),
                      pl.BlockSpec((B, 1, tc), lambda ci, ri: (0, 0, ci))],
            out_specs=pl.BlockSpec((B, thw, tc), lambda ci, ri: (0, ri, ci))),
        compiler_params=_cparams(("parallel", "parallel")),
    )(x3, gates.reshape(B, 1, C))
    return y.reshape(B, H, W, C)


# ---------------------------------------------------------------------------
# Head: adaptive avg pool (1,1) + Linear
# ---------------------------------------------------------------------------
def _head_kernel(p_ref, w_ref, b_ref, o_ref):
    o_ref[...] = jnp.dot(p_ref[...].astype(jnp.bfloat16), w_ref[...],
                         preferred_element_type=jnp.float32) + b_ref[...]


@jax.jit
def avgpool_fc(x, w, b):
    pooled = _pool_mean(x)                                   # (B, C) f32
    B, C = pooled.shape
    ncls = w.shape[1]
    return pl.pallas_call(
        _head_kernel,
        out_shape=jax.ShapeDtypeStruct((B, ncls), jnp.float32),
    )(pooled, w, b.reshape(1, ncls))


# ---------------------------------------------------------------------------
# Parameters (kaiming-normal fan_out for convs, stored in bf16 for the MXU)
# ---------------------------------------------------------------------------
def _kaiming_conv(key, kh, kw, cin, cout):
    std = (2.0 / (cout * kh * kw)) ** 0.5
    w = jax.random.normal(key, (kh, kw, cin, cout), jnp.float32) * std
    return w.astype(jnp.bfloat16)


def make_params(key, num_classes=2):
    keys = iter(jax.random.split(key, 512))
    params = {"conv1": _kaiming_conv(next(keys), 7, 7, 3, 64)}
    # (planes, blocks, stride, dilate); replace_stride_with_dilation=[F, T, T]
    cfg = [(64, 3, 1, False), (128, 4, 2, False),
           (256, 6, 2, True), (512, 3, 2, True)]
    in_planes = 64
    layers = []
    for planes, blocks, stride, dilate in cfg:
        if dilate:
            dilation, stride = stride, 1
        else:
            dilation = 1
        block_list = []
        for bidx in range(blocks):
            s = stride if bidx == 0 else 1
            width = planes
            cexp = planes * 4
            bp = {
                "conv1": _kaiming_conv(next(keys), 1, 1, in_planes, width),
                "conv2": _kaiming_conv(next(keys), 3, 3, width, width),
                "conv3": _kaiming_conv(next(keys), 1, 1, width, cexp),
                "se_w1": (jax.random.normal(next(keys), (cexp, cexp // 16),
                                            jnp.float32)
                          / (cexp ** 0.5)).astype(jnp.bfloat16),
                "se_w2": (jax.random.normal(next(keys), (cexp // 16, cexp),
                                            jnp.float32)
                          / ((cexp // 16) ** 0.5)).astype(jnp.bfloat16),
                "stride": s,
                "dilation": dilation,
            }
            if bidx == 0 and (s != 1 or in_planes != cexp):
                bp["down"] = _kaiming_conv(next(keys), 1, 1, in_planes, cexp)
            block_list.append(bp)
            in_planes = cexp
        layers.append(block_list)
    params["layers"] = layers
    params["fc_w"] = (jax.random.normal(next(keys), (512 * 4, num_classes),
                                        jnp.float32)
                      / (2048.0 ** 0.5)).astype(jnp.bfloat16)
    params["fc_b"] = jnp.zeros((num_classes,), jnp.float32)
    return params


# ---------------------------------------------------------------------------
# Model forward (SE applied after the residual add + ReLU, as in the spec)
# ---------------------------------------------------------------------------
def bottleneck_forward(x, bp):
    s, d = bp["stride"], bp["dilation"]
    width = bp["conv2"].shape[2]

    out, s1, q1 = conv_matmul(x, bp["conv1"])
    out = bn_apply(out, s1, q1, relu=True)

    if s != 1 or (width <= 128 and d == 1):
        # strided conv2 / small-width conv2: im2col gives deeper MXU K (=9*Cin)
        out, s2, q2 = conv_matmul(out, bp["conv2"], stride=s, dilation=d,
                                  padding=d)
    else:
        out = conv3x3_direct(out, bp["conv2"], dilation=d)
        s2, q2 = bn_stats(out)
    out = bn_apply(out, s2, q2, relu=True)

    out, s3, q3 = conv_matmul(out, bp["conv3"])
    if "down" in bp:
        idn, sd, qd = conv_matmul(x, bp["down"], stride=s)
        identity = bn_apply(idn, sd, qd, relu=False)
    else:
        identity = x
    out, pooled = bn_add_relu_pool(out, s3, q3, identity)   # bn3+add+relu+pool
    out = se_gate_apply(out, pooled, bp["se_w1"], bp["se_w2"])
    return out


def resnet50_dilated_forward(params, x_nchw):
    # PyTorch module is NCHW; compute in NHWC / bf16 internally
    x = jnp.transpose(x_nchw, (0, 2, 3, 1)).astype(jnp.bfloat16)
    x, s0, q0 = conv_matmul(x, params["conv1"], stride=2, padding=3)
    x = bn_apply(x, s0, q0, relu=True)
    x = maxpool_3x3_s2(x)
    for block_list in params["layers"]:
        for bp in block_list:
            x = bottleneck_forward(x, bp)
    return avgpool_fc(x, params["fc_w"], params["fc_b"])


if __name__ == "__main__":
    key = jax.random.PRNGKey(0)
    pkey, xkey = jax.random.split(key)
    params = make_params(pkey, num_classes=2)
    x = jax.random.normal(xkey, (2, 3, 32, 32), jnp.float32)  # [B, 3, H, W]
    out = resnet50_dilated_forward(params, x)
    out = jax.block_until_ready(out)
    assert out.shape == (2, 2) and out.dtype == jnp.float32
    print("KERNEL_OK")
</pallas_src>

<mosaic_0001>
module attributes {stable_mosaic.version = 11 : i64} {
  func.func @_matmul_bn_kernel(%arg0: i32, %arg1: i32, %arg2: i32, %arg3: memref<256x256xbf16, #tpu.memory_space<vmem>>, %arg4: memref<256x64xbf16, #tpu.memory_space<vmem>>, %arg5: memref<256x64xbf16, #tpu.memory_space<vmem>>, %arg6: memref<1x64xf32, #tpu.memory_space<vmem>>, %arg7: memref<1x64xf32, #tpu.memory_space<vmem>>, %arg8: memref<256x64xf32, #tpu.memory_space<vmem>>, %arg9: memref<1x64xf32, #tpu.memory_space<vmem>>, %arg10: memref<1x64xf32, #tpu.memory_space<vmem>>) attributes {dimension_semantics = [#tpu.dimension_semantics<parallel>, #tpu.dimension_semantics<arbitrary>, #tpu.dimension_semantics<arbitrary>], iteration_bounds = array<i64: 1, 2, 1>, scalar_prefetch = 0 : i64, scratch_operands = 3 : i64, tpu.core_type = #tpu.core_type<tc>, window_params = [{transform_indices = @transform_0, window_bounds = array<i64: 256, 256>}, {transform_indices = @transform_1, window_bounds = array<i64: 256, 64>}, {transform_indices = @transform_2, window_bounds = array<i64: 256, 64>}, {transform_indices = @transform_3, window_bounds = array<i64: 1, 64>}, {transform_indices = @transform_4, window_bounds = array<i64: 1, 64>}]} {
    %c0_i32 = arith.constant 0 : i32
    %0 = arith.cmpi eq, %arg2, %c0_i32 : i32
    %c0_i32_0 = arith.constant 0 : i32
    %1 = arith.cmpi eq, %arg2, %c0_i32_0 : i32
    %2 = arith.extui %1 : i1 to i32
    %c0_i32_1 = arith.constant 0 : i32
    %3 = arith.cmpi ne, %2, %c0_i32_1 : i32
    scf.if %3 {
      %cst_13 = arith.constant 0.000000e+00 : f32
      %20 = vector.broadcast %cst_13 : f32 to vector<256x64xf32>
      %c0_14 = arith.constant 0 : index
      %c0_15 = arith.constant 0 : index
      %21 = vector.load %arg8[%c0_14, %c0_15] : memref<256x64xf32, #tpu.memory_space<vmem>>, vector<256x64xf32>
      tpu.vector_store %arg8[%c0_14, %c0_15], %20 {strides = array<i32>} : memref<256x64xf32, #tpu.memory_space<vmem>>, vector<256x64xf32>,
    } else {
    }
    %c0 = arith.constant 0 : index
    %c0_2 = arith.constant 0 : index
    %4 = vector.load %arg8[%c0, %c0_2] : memref<256x64xf32, #tpu.memory_space<vmem>>, vector<256x64xf32>
    %c0_3 = arith.constant 0 : index
    %c0_4 = arith.constant 0 : index
    %5 = vector.load %arg3[%c0_3, %c0_4] : memref<256x256xbf16, #tpu.memory_space<vmem>>, vector<256x256xbf16>
    %c0_5 = arith.constant 0 : index
    %c0_6 = arith.constant 0 : index
    %6 = vector.load %arg4[%c0_5, %c0_6] : memref<256x64xbf16, #tpu.memory_space<vmem>>, vector<256x64xbf16>
    %cst = arith.constant dense<0.000000e+00> : vector<256x64xf32>
    %7 = tpu.matmul %5, %6, %cst {dimension_numbers = #tpu.dot_dimension_numbers<[1], [0], [0], [1], [0, 0, 1, 1], [], []>} : vector<256x256xbf16>, vector<256x64xbf16>, vector<256x64xf32> -> vector<256x64xf32>
    %8 = arith.addf %4, %7 : vector<256x64xf32>
    %c0_7 = arith.constant 0 : index
    %c0_8 = arith.constant 0 : index
    %9 = vector.load %arg8[%c0_7, %c0_8] : memref<256x64xf32, #tpu.memory_space<vmem>>, vector<256x64xf32>
    tpu.vector_store %arg8[%c0_7, %c0_8], %8 {strides = array<i32>} : memref<256x64xf32, #tpu.memory_space<vmem>>, vector<256x64xf32>,
    %c0_i32_9 = arith.constant 0 : i32
    %10 = arith.cmpi eq, %arg1, %c0_i32_9 : i32
    %11 = arith.andi %0, %10 : i1
    %12 = arith.extui %11 : i1 to i32
    %c0_i32_10 = arith.constant 0 : i32
    %13 = arith.cmpi ne, %12, %c0_i32_10 : i32
    scf.if %13 {
      %cst_13 = arith.constant 0.000000e+00 : f32
      %20 = vector.broadcast %cst_13 : f32 to vector<1x64xf32>
      %c0_14 = arith.constant 0 : index
      %c0_15 = arith.constant 0 : index
      %21 = vector.load %arg9[%c0_14, %c0_15] : memref<1x64xf32, #tpu.memory_space<vmem>>, vector<1x64xf32>
      tpu.vector_store %arg9[%c0_14, %c0_15], %20 {strides = array<i32>} : memref<1x64xf32, #tpu.memory_space<vmem>>, vector<1x64xf32>,
      %cst_16 = arith.constant 0.000000e+00 : f32
      %22 = vector.broadcast %cst_16 : f32 to vector<1x64xf32>
      %c0_17 = arith.constant 0 : index
      %c0_18 = arith.constant 0 : index
      %23 = vector.load %arg10[%c0_17, %c0_18] : memref<1x64xf32, #tpu.memory_space<vmem>>, vector<1x64xf32>
      tpu.vector_store %arg10[%c0_17, %c0_18], %22 {strides = array<i32>} : memref<1x64xf32, #tpu.memory_space<vmem>>, vector<1x64xf32>,
    } else {
    }
    %14 = arith.extui %0 : i1 to i32
    %c0_i32_11 = arith.constant 0 : i32
    %15 = arith.cmpi ne, %14, %c0_i32_11 : i32
    scf.if %15 {
      %c0_13 = arith.constant 0 : index
      %c0_14 = arith.constant 0 : index
      %20 = vector.load %arg8[%c0_13, %c0_14] : memref<256x64xf32, #tpu.memory_space<vmem>>, vector<256x64xf32>
      %21 = arith.truncf %20 : vector<256x64xf32> to vector<256x64xbf16>
      %c0_15 = arith.constant 0 : index
      %c0_16 = arith.constant 0 : index
      %22 = vector.load %arg5[%c0_15, %c0_16] : memref<256x64xbf16, #tpu.memory_space<vmem>>, vector<256x64xbf16>
      tpu.vector_store %arg5[%c0_15, %c0_16], %21 {strides = array<i32>} : memref<256x64xbf16, #tpu.memory_space<vmem>>, vector<256x64xbf16>,
      %c0_17 = arith.constant 0 : index
      %c0_18 = arith.constant 0 : index
      %23 = vector.load %arg9[%c0_17, %c0_18] : memref<1x64xf32, #tpu.memory_space<vmem>>, vector<1x64xf32>
      %cst_19 = arith.constant dense<0.000000e+00> : vector<64xf32>
      %24 = vector.multi_reduction <add>, %20, %cst_19 [0] : vector<256x64xf32> to vector<64xf32>
      %25 = vector.shape_cast %24 : vector<64xf32> to vector<1x64xf32>
      %26 = arith.addf %23, %25 : vector<1x64xf32>
      %c0_20 = arith.constant 0 : index
      %c0_21 = arith.constant 0 : index
      %27 = vector.load %arg9[%c0_20, %c0_21] : memref<1x64xf32, #tpu.memory_space<vmem>>, vector<1x64xf32>
      tpu.vector_store %arg9[%c0_20, %c0_21], %26 {strides = array<i32>} : memref<1x64xf32, #tpu.memory_space<vmem>>, vector<1x64xf32>,
      %c0_22 = arith.constant 0 : index
      %c0_23 = arith.constant 0 : index
      %28 = vector.load %arg10[%c0_22, %c0_23] : memref<1x64xf32, #tpu.memory_space<vmem>>, vector<1x64xf32>
      %29 = arith.mulf %20, %20 : vector<256x64xf32>
      %cst_24 = arith.constant dense<0.000000e+00> : vector<64xf32>
      %30 = vector.multi_reduction <add>, %29, %cst_24 [0] : vector<256x64xf32> to vector<64xf32>
      %31 = vector.shape_cast %30 : vector<64xf32> to vector<1x64xf32>
      %32 = arith.addf %28, %31 : vector<1x64xf32>
      %c0_25 = arith.constant 0 : index
      %c0_26 = arith.constant 0 : index
      %33 = vector.load %arg10[%c0_25, %c0_26] : memref<1x64xf32, #tpu.memory_space<vmem>>, vector<1x64xf32>
      tpu.vector_store %arg10[%c0_25, %c0_26], %32 {strides = array<i32>} : memref<1x64xf32, #tpu.memory_space<vmem>>, vector<1x64xf32>,
    } else {
    }
    %c1_i32 = arith.constant 1 : i32
    %16 = arith.cmpi eq, %arg1, %c1_i32 : i32
    %17 = arith.andi %0, %16 : i1
    %18 = arith.extui %17 : i1 to i32
    %c0_i32_12 = arith.constant 0 : i32
    %19 = arith.cmpi ne, %18, %c0_i32_12 : i32
    scf.if %19 {
      %c0_13 = arith.constant 0 : index
      %c0_14 = arith.constant 0 : index
      %20 = vector.load %arg9[%c0_13, %c0_14] : memref<1x64xf32, #tpu.memory_space<vmem>>, vector<1x64xf32>
      %c0_15 = arith.constant 0 : index
      %c0_16 = arith.constant 0 : index
      %21 = vector.load %arg6[%c0_15, %c0_16] : memref<1x64xf32, #tpu.memory_space<vmem>>, vector<1x64xf32>
      tpu.vector_store %arg6[%c0_15, %c0_16], %20 {strides = array<i32>} : memref<1x64xf32, #tpu.memory_space<vmem>>, vector<1x64xf32>,
      %c0_17 = arith.constant 0 : index
      %c0_18 = arith.constant 0 : index
      %22 = vector.load %arg10[%c0_17, %c0_18] : memref<1x64xf32, #tpu.memory_space<vmem>>, vector<1x64xf32>
      %c0_19 = arith.constant 0 : index
      %c0_20 = arith.constant 0 : index
      %23 = vector.load %arg7[%c0_19, %c0_20] : memref<1x64xf32, #tpu.memory_space<vmem>>, vector<1x64xf32>
      tpu.vector_store %arg7[%c0_19, %c0_20], %22 {strides = array<i32>} : memref<1x64xf32, #tpu.memory_space<vmem>>, vector<1x64xf32>,
    } else {
    }
    return
  }
  func.func @transform_0(%arg0: i32, %arg1: i32, %arg2: i32) -> (i32, i32) {
    %c0_i32 = arith.constant 0 : i32
    return %arg1, %arg2 : i32, i32
  }
  func.func @transform_1(%arg0: i32, %arg1: i32, %arg2: i32) -> (i32, i32) {
    %c0_i32 = arith.constant 0 : i32
    return %arg2, %arg0 : i32, i32
  }
  func.func @transform_2(%arg0: i32, %arg1: i32, %arg2: i32) -> (i32, i32) {
    %c0_i32 = arith.constant 0 : i32
    return %arg1, %arg0 : i32, i32
  }
  func.func @transform_3(%arg0: i32, %arg1: i32, %arg2: i32) -> (i32, i32) {
    %c0_i32 = arith.constant 0 : i32
    %c0_i32_0 = arith.constant 0 : i32
    return %c0_i32, %arg0 : i32, i32
  }
  func.func @transform_4(%arg0: i32, %arg1: i32, %arg2: i32) -> (i32, i32) {
    %c0_i32 = arith.constant 0 : i32
    %c0_i32_0 = arith.constant 0 : i32
    return %c0_i32, %arg0 : i32, i32
  }
}

</mosaic_0001>

<llo_original>
// kernel: conv_matmul.1
$region0: #{conv_matmul.1}
  #allocation0 [shape = 'u32[]', space=smem, size = 0x4, offset = 0x4, fixed_abs, tag = 'smem constant byte address 0x4 - core index']
  #allocation1 [shape = 'u32[144,128]{1,0:T(1,128)}', space=vmem, size = 0x12000, scoped, tag = 'internal scratch']
  #allocation2 [shape = 'f32[256,64]{1,0:T(8,128)}', space=vmem, size = 0x20000, scoped, tag = 'scratch operand']
  #allocation3 [shape = 'f32[1,64]{1,0:T(1,128)}', space=vmem, size = 0x200, scoped, tag = 'scratch operand']
  #allocation4 [shape = 'f32[1,64]{1,0:T(1,128)}', space=vmem, size = 0x200, scoped, tag = 'scratch operand']
  %s0 = inlined_call_operand.vmem [shape: bf16[512,256], index: 0, kind: input, shape index: {}]
  %s1 = inlined_call_operand.vmem [shape: bf16[256,64], index: 1, kind: input, shape index: {}]
  %s2 = inlined_call_operand.hbm [shape: bf16[512,64], index: 2, kind: output, shape index: {0}]
  %s3 = inlined_call_operand.hbm [shape: f32[1,64], index: 3, kind: output, shape index: {1}]
  %s4 = inlined_call_operand.hbm [shape: f32[1,64], index: 4, kind: output, shape index: {2}]
  %5 = xla_tuple %s2, %s3, %s4
  %s6 = sld [smem:[#allocation0]]
  $region73: #{conv_matmul.1} parent=0
    _
  %s8 = ssub.s32 1, %s6
  %s9 = scalar_select 0, %s8, %s6
  $region1: #{conv_matmul.1} parent=0
    #allocation5 [shape = 'u8[131072]{0}', space=vmem, size = 0x20000, scoped, tag = 'output window, operand 0']
    #allocation6 [shape = 's32[2]{0}', space=sflag, size = 0x8, scoped, tag = 'scoped memory for conv_matmul.1']
    #allocation7 [shape = 'u8[512]{0}', space=vmem, size = 0x400, scoped, tag = 'output window, operand 1, single buffered']
    #allocation8 [shape = 's32[1]{0}', space=sflag, size = 0x4, scoped, tag = 'scoped memory for conv_matmul.1']
    #allocation9 [shape = 'u8[512]{0}', space=vmem, size = 0x400, scoped, tag = 'output window, operand 2, single buffered']
    %10 = vsyncpa [#allocation6], 0
    %s11 = scalar_lea.sflag [#allocation6], 1
    %12 = vsyncpa %s11, 0
    %13 = vsyncpa [#allocation8], 0
    loop: start=0, step=1, limit=4
    $region2: #{conv_matmul.1} parent=1 // loop_pre_header
      _
    $region3: #{conv_matmul.1} parent=1 // loop_header
      %s15 = sphi 0, %s19
      %p16 = scmp.ge.s32.totalorder %s15, 4
      %s22 = sphi 0, %s41
      %s23 = sphi 0, %s37
      %s24 = sphi 0, %s33
      %s25 = sphi 0, %s22
      %s26 = sphi 0, %s23
      %s27 = sphi 0, %s24
      %s28 = sphi 0, %s25
      %s29 = sphi 0, %s26
      %s30 = sphi 0, %s27
      %s46 = sphi 0, %s48
      %s49 = sphi 0, %s46
      %s50 = sphi 0, %s49
      %s66 = sphi 0, %s50
      %s74 = sphi 0, %s76
      %s77 = sphi 0, %s74
      %s78 = sphi 0, %s77
      %s94 = sphi 0, %s78
      %s102 = sphi 0, %s104
      %s105 = sphi 0, %s102
      %s106 = sphi 0, %s105
      %s122 = sphi 0, %s106
      %s128 = sphi 0, %s130
      %s131 = sphi 0, %s128
      %s132 = sphi 0, %s131
      %s148 = sphi 0, %s132
      %s154 = sphi 0, %s156
      %s157 = sphi 0, %s154
      %s158 = sphi 0, %s157
      %s174 = sphi 0, %s158
    $region4: #{conv_matmul.1} parent=1 // loop_header_branch
      %18 = sbr.rel (%p16) target = $region8
    $region5: #{conv_matmul.1} parent=1 // loop_body
      %s20 = ssub.s32 %s15, 1
      %s21 = ssub.s32 %s15, 2
      %s31 = sadd.s32 1, %s24
      %p32 = scmp.ge.s32.totalorder %s31, 1
      %s33 = scalar_select %p32, 0, %s31
      %s34 = sadd.s32 1, %s23
      %s35 = scalar_select %p32, %s34, %s23
      %p36 = scmp.ge.s32.totalorder %s35, 2
      %s37 = scalar_select %p36, 0, %s35
      %s38 = sadd.s32 1, %s22
      %s39 = scalar_select %p36, %s38, %s22
      %p40 = scmp.ge.s32.totalorder %s39, 1
      %s41 = scalar_select %p40, 0, %s39
      %s42 = ssub.s32 %s23, %s37
      %s43 = ssub.s32 %s24, %s33
      %s44 = sor.u32 %s42, %s43
      %p45 = scmp.eq.s32.totalorder %s44, 0
      %s47 = sadd.s32 %s46, 1
      %s48 = scalar_select %p45, %s46, %s47
      %p51 = pneg %p45
      %p52 = scmp.eq.s32.totalorder %s15, 1
      %p53 = por %p51, %p52
      %p54 = scmp.ne.s32.totalorder %s46, %s49
      %p55 = scmp.eq.s32.totalorder %s15, 0
      %p56 = por %p54, %p55
      %p57 = scmp.ne.s32.totalorder %s46, %s49
      %p58 = scmp.eq.s32.totalorder %s20, 1
      %p59 = por %p57, %p58
      %p60 = scmp.ne.s32.totalorder %s49, %s50
      %p61 = scmp.eq.s32.totalorder %s20, 0
      %p62 = por %p60, %p61
      %p63 = scmp.ne.s32.totalorder %s49, %s50
      %p64 = scmp.eq.s32.totalorder %s21, 1
      %p65 = por %p63, %p64
      %p67 = scmp.ne.s32.totalorder %s50, %s66
      %p68 = scmp.eq.s32.totalorder %s21, 0
      %p69 = por %p67, %p68
      %s70 = ssub.s32 %s24, %s33
      %s71 = ssub.s32 %s22, %s41
      %s72 = sor.u32 %s70, %s71
      %p73 = scmp.eq.s32.totalorder %s72, 0
      %s75 = sadd.s32 %s74, 1
      %s76 = scalar_select %p73, %s74, %s75
      %p79 = pneg %p73
      %p80 = scmp.eq.s32.totalorder %s15, 1
      %p81 = por %p79, %p80
      %p82 = scmp.ne.s32.totalorder %s74, %s77
      %p83 = scmp.eq.s32.totalorder %s15, 0
      %p84 = por %p82, %p83
      %p85 = scmp.ne.s32.totalorder %s74, %s77
      %p86 = scmp.eq.s32.totalorder %s20, 1
      %p87 = por %p85, %p86
      %p88 = scmp.ne.s32.totalorder %s77, %s78
      %p89 = scmp.eq.s32.totalorder %s20, 0
      %p90 = por %p88, %p89
      %p91 = scmp.ne.s32.totalorder %s77, %s78
      %p92 = scmp.eq.s32.totalorder %s21, 1
      %p93 = por %p91, %p92
      %p95 = scmp.ne.s32.totalorder %s78, %s94
      %p96 = scmp.eq.s32.totalorder %s21, 0
      %p97 = por %p95, %p96
      %s98 = ssub.s32 %s23, %s37
      %s99 = ssub.s32 %s22, %s41
      %s100 = sor.u32 %s98, %s99
      %p101 = scmp.eq.s32.totalorder %s100, 0
      %s103 = sadd.s32 %s102, 1
      %s104 = scalar_select %p101, %s102, %s103
      %p107 = pneg %p101
      %p108 = scmp.eq.s32.totalorder %s15, 1
      %p109 = por %p107, %p108
      %p110 = scmp.ne.s32.totalorder %s102, %s105
      %p111 = scmp.eq.s32.totalorder %s15, 0
      %p112 = por %p110, %p111
      %p113 = scmp.ne.s32.totalorder %s102, %s105
      %p114 = scmp.eq.s32.totalorder %s20, 1
      %p115 = por %p113, %p114
      %p116 = scmp.ne.s32.totalorder %s105, %s106
      %p117 = scmp.eq.s32.totalorder %s20, 0
      %p118 = por %p116, %p117
      %p119 = scmp.ne.s32.totalorder %s105, %s106
      %p120 = scmp.eq.s32.totalorder %s21, 1
      %p121 = por %p119, %p120
      %p123 = scmp.ne.s32.totalorder %s106, %s122
      %p124 = scmp.eq.s32.totalorder %s21, 0
      %p125 = por %p123, %p124
      %s126 = ssub.s32 %s22, %s41
      %p127 = scmp.eq.s32.totalorder %s126, 0
      %s129 = sadd.s32 %s128, 1
      %s130 = scalar_select %p127, %s128, %s129
      %p133 = pneg %p127
      %p134 = scmp.eq.s32.totalorder %s15, 1
      %p135 = por %p133, %p134
      %p136 = scmp.ne.s32.totalorder %s128, %s131
      %p137 = scmp.eq.s32.totalorder %s15, 0
      %p138 = por %p136, %p137
      %p139 = scmp.ne.s32.totalorder %s128, %s131
      %p140 = scmp.eq.s32.totalorder %s20, 1
      %p141 = por %p139, %p140
      %p142 = scmp.ne.s32.totalorder %s131, %s132
      %p143 = scmp.eq.s32.totalorder %s20, 0
      %p144 = por %p142, %p143
      %p145 = scmp.ne.s32.totalorder %s131, %s132
      %p146 = scmp.eq.s32.totalorder %s21, 1
      %p147 = por %p145, %p146
      %p149 = scmp.ne.s32.totalorder %s132, %s148
      %p150 = scmp.eq.s32.totalorder %s21, 0
      %p151 = por %p149, %p150
      %s152 = ssub.s32 %s22, %s41
      %p153 = scmp.eq.s32.totalorder %s152, 0
      %s155 = sadd.s32 %s154, 1
      %s156 = scalar_select %p153, %s154, %s155
      %p159 = pneg %p153
      %p160 = scmp.eq.s32.totalorder %s15, 1
      %p161 = por %p159, %p160
      %p162 = scmp.ne.s32.totalorder %s154, %s157
      %p163 = scmp.eq.s32.totalorder %s15, 0
      %p164 = por %p162, %p163
      %p165 = scmp.ne.s32.totalorder %s154, %s157
      %p166 = scmp.eq.s32.totalorder %s20, 1
      %p167 = por %p165, %p166
      %p168 = scmp.ne.s32.totalorder %s157, %s158
      %p169 = scmp.eq.s32.totalorder %s20, 0
      %p170 = por %p168, %p169
      %p171 = scmp.ne.s32.totalorder %s157, %s158
      %p172 = scmp.eq.s32.totalorder %s21, 1
      %p173 = por %p171, %p172
      %p175 = scmp.ne.s32.totalorder %s158, %s174
      %p176 = scmp.eq.s32.totalorder %s21, 0
      %p177 = por %p175, %p176
      %p178 = scmp.le.s32.totalorder 1, %s15
      %p179 = scmp.lt.s32.totalorder %s15, 3
      %p180 = pnand %p178, %p179
      %p181 = pneg %p180
      // Predicated region
      $region9: #{conv_matmul.1} parent=5 // pred_check
        _
      $region10: #{conv_matmul.1} parent=5 // pred_check_branch
        %183 = sbr.rel (%p180) target = $region12
      $region11: #{conv_matmul.1} parent=5 // pred_region
        %s184 = ssub.s32 %s15, 1
        // Predicated region
        $region13: #{conv_matmul.1} parent=11 // pred_check
          %p185 = pneg %p90
        $region14: #{conv_matmul.1} parent=11 // pred_check_branch
          %187 = sbr.rel (%p185) target = $region16
        $region15: #{conv_matmul.1} parent=11 // pred_region
          %s188 = smul.u32 32, %s27
          %p189 = scmp.lt.s32.totalorder %s188, 31
          %s190 = scalar_select %p189, %s188, 31
          %p191 = scmp.lt.s32.totalorder %s25, 0
          %s192 = scalar_select %p191, %s25, 0
          %s193 = sadd.s32 %s192, %s190
          %s194 = smul.addr %s193, 4
          %s195 = scalar_lea.vmem %s1, %s194
          %s196 = smul.u32 32, %s27
        $region16: #{conv_matmul.1} parent=11 // pred_fallthru
          _
      $region12: #{conv_matmul.1} parent=5 // pred_fallthru
        _
      %p197 = scmp.lt.s32.totalorder %s15, 2
      // Predicated region
      $region17: #{conv_matmul.1} parent=5 // pred_check
        %p198 = pneg %p197
      $region18: #{conv_matmul.1} parent=5 // pred_check_branch
        %200 = sbr.rel (%p198) target = $region20
      $region19: #{conv_matmul.1} parent=5 // pred_region
        // Predicated region
        $region21: #{conv_matmul.1} parent=19 // pred_check
          %p201 = pneg %p56
        $region22: #{conv_matmul.1} parent=19 // pred_check_branch
          %203 = sbr.rel (%p201) target = $region24
        $region23: #{conv_matmul.1} parent=19 // pred_region
          %s204 = smul.u32 32, %s23
          %s205 = smul.u32 2, %s24
          %p206 = scmp.lt.s32.totalorder %s204, 63
          %s207 = scalar_select %p206, %s204, 63
          %p208 = scmp.lt.s32.totalorder %s205, 1
          %s209 = scalar_select %p208, %s205, 1
          %s210 = smul.addr %s207, 2
          %s211 = sadd.s32 %s209, %s210
          %s212 = smul.addr %s211, 4
          %s213 = scalar_lea.vmem %s0, %s212
          %s214 = smul.u32 32, %s23
          %s215 = smul.u32 2, %s24
        $region24: #{conv_matmul.1} parent=19 // pred_fallthru
          _
      $region20: #{conv_matmul.1} parent=5 // pred_fallthru
        _
      %p216 = scmp.le.s32.totalorder 1, %s15
      %p217 = scmp.lt.s32.totalorder %s15, 3
      %p218 = pnand %p216, %p217
      %p219 = pneg %p218
      // Predicated region
      $region25: #{conv_matmul.1} parent=5 // pred_check
        _
      $region26: #{conv_matmul.1} parent=5 // pred_check_branch
        %221 = sbr.rel (%p218) target = $region28
      $region27: #{conv_matmul.1} parent=5 // pred_region
        %s222 = ssub.s32 %s15, 1
        %s223 = smul.u32 32, %s26
        %s224 = smul.u32 2, %s27
        %p225 = scmp.lt.s32.totalorder %s223, 63
        %s226 = scalar_select %p225, %s223, 63
        %p227 = scmp.lt.s32.totalorder %s224, 1
        %s228 = scalar_select %p227, %s224, 1
        %s229 = smul.addr %s226, 2
        %s230 = sadd.s32 %s228, %s229
        %s231 = smul.addr %s230, 4
        %s232 = scalar_lea.vmem %s0, %s231
        %p233 = pneg %p62
        %p234 = pneg %p59
        %s235 = smul.u32 32, %s27
        %p236 = scmp.lt.s32.totalorder %s235, 31
        %s237 = scalar_select %p236, %s235, 31
        %p238 = scmp.lt.s32.totalorder %s25, 0
        %s239 = scalar_select %p238, %s25, 0
        %s240 = sadd.s32 %s239, %s237
        %s241 = smul.addr %s240, 4
        %s242 = scalar_lea.vmem %s1, %s241
        %p243 = pneg %p90
        %p244 = pneg %p87
        %p245 = pneg %p118
        %p246 = pneg %p115
        %s247 = sand.u32 %s105, 1
        %s248 = scalar_lea.sflag [#allocation6], %s247
        %s249 = sand.u32 %s105, 1
        %s250 = smul.addr %s249, 128
        %s251 = scalar_lea.vmem [#allocation5], %s250
        %p252 = pneg %p144
        %p253 = pneg %p141
        %p254 = pneg %p170
        %p255 = pneg %p167
        %s256 = smul.u32 32, %s26
        %s257 = smul.u32 2, %s27
        %p258 = scmp.lt.s32.totalorder %s256, 63
        %s259 = scalar_select %p258, %s256, 63
        %p260 = scmp.lt.s32.totalorder %s257, 1
        %s261 = scalar_select %p260, %s257, 1
        %s262 = smul.addr %s259, 2
        %s263 = sadd.s32 %s261, %s262
        %s264 = smul.addr %s263, 4
        %s265 = scalar_lea.vmem %s0, %s264
        %s266 = smul.u32 32, %s26
        %s267 = smul.u32 2, %s27
        %s268 = smul.u32 32, %s27
        %p269 = scmp.lt.s32.totalorder %s268, 31
        %s270 = scalar_select %p269, %s268, 31
        %p271 = scmp.lt.s32.totalorder %s25, 0
        %s272 = scalar_select %p271, %s25, 0
        %s273 = sadd.s32 %s272, %s270
        %s274 = smul.addr %s273, 4
        %s275 = scalar_lea.vmem %s1, %s274
        %s276 = smul.u32 32, %s27
        %s277 = smul.u32 32, %s26
        %p279 = scmp.eq.s32.totalorder %s27, 0
        // Predicated region
        $region29: #{conv_matmul.1} parent=27 // pred_check
          %p280 = pneg %p279
        $region30: #{conv_matmul.1} parent=27 // pred_check_branch
          %282 = sbr.rel (%p280) target = $region32
        $region31: #{conv_matmul.1} parent=27 // pred_region
          %vm283 = vcmask 523264
          %284 = vst.msk [vmem:[#allocation2] sm:$0xff] %vm283, 0.0
          %285 = vst.msk [vmem:[#allocation2 + $0x8] sm:$0xff] %vm283, 0.0
          %286 = vst.msk [vmem:[#allocation2 + $0x10] sm:$0xff] %vm283, 0.0
          %287 = vst.msk [vmem:[#allocation2 + $0x18] sm:$0xff] %vm283, 0.0
          %288 = vst.msk [vmem:[#allocation2 + $0x20] sm:$0xff] %vm283, 0.0
          %289 = vst.msk [vmem:[#allocation2 + $0x28] sm:$0xff] %vm283, 0.0
          %290 = vst.msk [vmem:[#allocation2 + $0x30] sm:$0xff] %vm283, 0.0
          %291 = vst.msk [vmem:[#allocation2 + $0x38] sm:$0xff] %vm283, 0.0
          %292 = vst.msk [vmem:[#allocation2 + $0x40] sm:$0xff] %vm283, 0.0
          %293 = vst.msk [vmem:[#allocation2 + $0x48] sm:$0xff] %vm283, 0.0
          %294 = vst.msk [vmem:[#allocation2 + $0x50] sm:$0xff] %vm283, 0.0
          %295 = vst.msk [vmem:[#allocation2 + $0x58] sm:$0xff] %vm283, 0.0
          %296 = vst.msk [vmem:[#allocation2 + $0x60] sm:$0xff] %vm283, 0.0
          %297 = vst.msk [vmem:[#allocation2 + $0x68] sm:$0xff] %vm283, 0.0
          %298 = vst.msk [vmem:[#allocation2 + $0x70] sm:$0xff] %vm283, 0.0
          %299 = vst.msk [vmem:[#allocation2 + $0x78] sm:$0xff] %vm283, 0.0
          %300 = vst.msk [vmem:[#allocation2 + $0x80] sm:$0xff] %vm283, 0.0
          %301 = vst.msk [vmem:[#allocation2 + $0x88] sm:$0xff] %vm283, 0.0
          %302 = vst.msk [vmem:[#allocation2 + $0x90] sm:$0xff] %vm283, 0.0
          %303 = vst.msk [vmem:[#allocation2 + $0x98] sm:$0xff] %vm283, 0.0
          %304 = vst.msk [vmem:[#allocation2 + $0xa0] sm:$0xff] %vm283, 0.0
          %305 = vst.msk [vmem:[#allocation2 + $0xa8] sm:$0xff] %vm283, 0.0
          %306 = vst.msk [vmem:[#allocation2 + $0xb0] sm:$0xff] %vm283, 0.0
          %307 = vst.msk [vmem:[#allocation2 + $0xb8] sm:$0xff] %vm283, 0.0
          %308 = vst.msk [vmem:[#allocation2 + $0xc0] sm:$0xff] %vm283, 0.0
          %309 = vst.msk [vmem:[#allocation2 + $0xc8] sm:$0xff] %vm283, 0.0
          %310 = vst.msk [vmem:[#allocation2 + $0xd0] sm:$0xff] %vm283, 0.0
          %311 = vst.msk [vmem:[#allocation2 + $0xd8] sm:$0xff] %vm283, 0.0
          %312 = vst.msk [vmem:[#allocation2 + $0xe0] sm:$0xff] %vm283, 0.0
          %313 = vst.msk [vmem:[#allocation2 + $0xe8] sm:$0xff] %vm283, 0.0
          %314 = vst.msk [vmem:[#allocation2 + $0xf0] sm:$0xff] %vm283, 0.0
          %315 = vst.msk [vmem:[#allocation2 + $0xf8] sm:$0xff] %vm283, 0.0
        $region32: #{conv_matmul.1} parent=27 // pred_fallthru
          _
        %v316 = vld [vmem:[#allocation2] sm:$0xff]
        %v317 = vld [vmem:[#allocation2 + $0x8] sm:$0xff]
        %v318 = vld [vmem:[#allocation2 + $0x10] sm:$0xff]
        %v319 = vld [vmem:[#allocation2 + $0x18] sm:$0xff]
        %v320 = vld [vmem:[#allocation2 + $0x20] sm:$0xff]
        %v321 = vld [vmem:[#allocation2 + $0x28] sm:$0xff]
        %v322 = vld [vmem:[#allocation2 + $0x30] sm:$0xff]
        %v323 = vld [vmem:[#allocation2 + $0x38] sm:$0xff]
        %v324 = vld [vmem:[#allocation2 + $0x40] sm:$0xff]
        %v325 = vld [vmem:[#allocation2 + $0x48] sm:$0xff]
        %v326 = vld [vmem:[#allocation2 + $0x50] sm:$0xff]
        %v327 = vld [vmem:[#allocation2 + $0x58] sm:$0xff]
        %v328 = vld [vmem:[#allocation2 + $0x60] sm:$0xff]
        %v329 = vld [vmem:[#allocation2 + $0x68] sm:$0xff]
        %v330 = vld [vmem:[#allocation2 + $0x70] sm:$0xff]
        %v331 = vld [vmem:[#allocation2 + $0x78] sm:$0xff]
        %v332 = vld [vmem:[#allocation2 + $0x80] sm:$0xff]
        %v333 = vld [vmem:[#allocation2 + $0x88] sm:$0xff]
        %v334 = vld [vmem:[#allocation2 + $0x90] sm:$0xff]
        %v335 = vld [vmem:[#allocation2 + $0x98] sm:$0xff]
        %v336 = vld [vmem:[#allocation2 + $0xa0] sm:$0xff]
        %v337 = vld [vmem:[#allocation2 + $0xa8] sm:$0xff]
        %v338 = vld [vmem:[#allocation2 + $0xb0] sm:$0xff]
        %v339 = vld [vmem:[#allocation2 + $0xb8] sm:$0xff]
        %v340 = vld [vmem:[#allocation2 + $0xc0] sm:$0xff]
        %v341 = vld [vmem:[#allocation2 + $0xc8] sm:$0xff]
        %v342 = vld [vmem:[#allocation2 + $0xd0] sm:$0xff]
        %v343 = vld [vmem:[#allocation2 + $0xd8] sm:$0xff]
        %v344 = vld [vmem:[#allocation2 + $0xe0] sm:$0xff]
        %v345 = vld [vmem:[#allocation2 + $0xe8] sm:$0xff]
        %v346 = vld [vmem:[#allocation2 + $0xf0] sm:$0xff]
        %v347 = vld [vmem:[#allocation2 + $0xf8] sm:$0xff]
        %v348 = vld [vmem:[%s265] sm:$0xff]
        %v349 = vld [vmem:[%s265 + $0x8] sm:$0xff]
        %v350 = vld [vmem:[%s265 + $0x10] sm:$0xff]
        %v351 = vld [vmem:[%s265 + $0x18] sm:$0xff]
        %v352 = vld [vmem:[%s265 + $0x20] sm:$0xff]
        %v353 = vld [vmem:[%s265 + $0x28] sm:$0xff]
        %v354 = vld [vmem:[%s265 + $0x30] sm:$0xff]
        %v355 = vld [vmem:[%s265 + $0x38] sm:$0xff]
        %v356 = vld [vmem:[%s265 + $0x40] sm:$0xff]
        %v357 = vld [vmem:[%s265 + $0x48] sm:$0xff]
        %v358 = vld [vmem:[%s265 + $0x50] sm:$0xff]
        %v359 = vld [vmem:[%s265 + $0x58] sm:$0xff]
        %v360 = vld [vmem:[%s265 + $0x60] sm:$0xff]
        %v361 = vld [vmem:[%s265 + $0x68] sm:$0xff]
        %v362 = vld [vmem:[%s265 + $0x70] sm:$0xff]
        %v363 = vld [vmem:[%s265 + $0x78] sm:$0xff]
        %v364 = vld [vmem:[%s265 + $0x80] sm:$0xff]
        %v365 = vld [vmem:[%s265 + $0x88] sm:$0xff]
        %v366 = vld [vmem:[%s265 + $0x90] sm:$0xff]
        %v367 = vld [vmem:[%s265 + $0x98] sm:$0xff]
        %v368 = vld [vmem:[%s265 + $0xa0] sm:$0xff]
        %v369 = vld [vmem:[%s265 + $0xa8] sm:$0xff]
        %v370 = vld [vmem:[%s265 + $0xb0] sm:$0xff]
        %v371 = vld [vmem:[%s265 + $0xb8] sm:$0xff]
        %v372 = vld [vmem:[%s265 + $0xc0] sm:$0xff]
        %v373 = vld [vmem:[%s265 + $0xc8] sm:$0xff]
        %v374 = vld [vmem:[%s265 + $0xd0] sm:$0xff]
        %v375 = vld [vmem:[%s265 + $0xd8] sm:$0xff]
        %v376 = vld [vmem:[%s265 + $0xe0] sm:$0xff]
        %v377 = vld [vmem:[%s265 + $0xe8] sm:$0xff]
        %v378 = vld [vmem:[%s265 + $0xf0] sm:$0xff]
        %v379 = vld [vmem:[%s265 + $0xf8] sm:$0xff]
        %v380 = vld [vmem:[%s275] sm:$0xf]
        %v381 = vld [vmem:[%s275 + $0x4] sm:$0xf]
        %v382 = vld [vmem:[%s275 + $0x8] sm:$0xf]
        %v383 = vld [vmem:[%s275 + $0xc] sm:$0xf]
        %v384 = vld [vmem:[%s275 + $0x10] sm:$0xf]
        %v385 = vld [vmem:[%s275 + $0x14] sm:$0xf]
        %v386 = vld [vmem:[%s275 + $0x18] sm:$0xf]
        %v387 = vld [vmem:[%s275 + $0x1c] sm:$0xf]
        %v388 = vld [vmem:[%s275 + $0x20] sm:$0xf]
        %v389 = vld [vmem:[%s275 + $0x24] sm:$0xf]
        %v390 = vld [vmem:[%s275 + $0x28] sm:$0xf]
        %v391 = vld [vmem:[%s275 + $0x2c] sm:$0xf]
        %v392 = vld [vmem:[%s275 + $0x30] sm:$0xf]
        %v393 = vld [vmem:[%s275 + $0x34] sm:$0xf]
        %v394 = vld [vmem:[%s275 + $0x38] sm:$0xf]
        %v395 = vld [vmem:[%s275 + $0x3c] sm:$0xf]
        %v396 = vld [vmem:[%s275 + $0x40] sm:$0xf]
        %v397 = vld [vmem:[%s275 + $0x44] sm:$0xf]
        %v398 = vld [vmem:[%s275 + $0x48] sm:$0xf]
        %v399 = vld [vmem:[%s275 + $0x4c] sm:$0xf]
        %v400 = vld [vmem:[%s275 + $0x50] sm:$0xf]
        %v401 = vld [vmem:[%s275 + $0x54] sm:$0xf]
        %v402 = vld [vmem:[%s275 + $0x58] sm:$0xf]
        %v403 = vld [vmem:[%s275 + $0x5c] sm:$0xf]
        %v404 = vld [vmem:[%s275 + $0x60] sm:$0xf]
        %v405 = vld [vmem:[%s275 + $0x64] sm:$0xf]
        %v406 = vld [vmem:[%s275 + $0x68] sm:$0xf]
        %v407 = vld [vmem:[%s275 + $0x6c] sm:$0xf]
        %v408 = vld [vmem:[%s275 + $0x70] sm:$0xf]
        %v409 = vld [vmem:[%s275 + $0x74] sm:$0xf]
        %v410 = vld [vmem:[%s275 + $0x78] sm:$0xf]
        %v411 = vld [vmem:[%s275 + $0x7c] sm:$0xf]
        %v444 = vunpack.c.l.b16 %v348
        %v445 = vunpack.c.h.b16 %v348
        %v446 = vunpack.c.l.b16 %v349
        %v447 = vunpack.c.h.b16 %v349
        %v448 = vunpack.c.l.b16 %v350
        %v449 = vunpack.c.h.b16 %v350
        %v450 = vunpack.c.l.b16 %v351
        %v451 = vunpack.c.h.b16 %v351
        %v452 = vunpack.c.l.b16 %v352
        %v453 = vunpack.c.h.b16 %v352
        %v454 = vunpack.c.l.b16 %v353
        %v455 = vunpack.c.h.b16 %v353
        %v456 = vunpack.c.l.b16 %v354
        %v457 = vunpack.c.h.b16 %v354
        %v458 = vunpack.c.l.b16 %v355
        %v459 = vunpack.c.h.b16 %v355
        %v460 = vunpack.c.l.b16 %v356
        %v461 = vunpack.c.h.b16 %v356
        %v462 = vunpack.c.l.b16 %v357
        %v463 = vunpack.c.h.b16 %v357
        %v464 = vunpack.c.l.b16 %v358
        %v465 = vunpack.c.h.b16 %v358
        %v466 = vunpack.c.l.b16 %v359
        %v467 = vunpack.c.h.b16 %v359
        %v468 = vunpack.c.l.b16 %v360
        %v469 = vunpack.c.h.b16 %v360
        %v470 = vunpack.c.l.b16 %v361
        %v471 = vunpack.c.h.b16 %v361
        %v472 = vunpack.c.l.b16 %v362
        %v473 = vunpack.c.h.b16 %v362
        %v474 = vunpack.c.l.b16 %v363
        %v475 = vunpack.c.h.b16 %v363
        %v476 = vunpack.c.l.b16 %v364
        %v477 = vunpack.c.h.b16 %v364
        %v478 = vunpack.c.l.b16 %v365
        %v479 = vunpack.c.h.b16 %v365
        %v480 = vunpack.c.l.b16 %v366
        %v481 = vunpack.c.h.b16 %v366
        %v482 = vunpack.c.l.b16 %v367
        %v483 = vunpack.c.h.b16 %v367
        %v484 = vunpack.c.l.b16 %v368
        %v485 = vunpack.c.h.b16 %v368
        %v486 = vunpack.c.l.b16 %v369
        %v487 = vunpack.c.h.b16 %v369
        %v488 = vunpack.c.l.b16 %v370
        %v489 = vunpack.c.h.b16 %v370
        %v490 = vunpack.c.l.b16 %v371
        %v491 = vunpack.c.h.b16 %v371
        %v492 = vunpack.c.l.b16 %v372
        %v493 = vunpack.c.h.b16 %v372
        %v494 = vunpack.c.l.b16 %v373
        %v495 = vunpack.c.h.b16 %v373
        %v496 = vunpack.c.l.b16 %v374
        %v497 = vunpack.c.h.b16 %v374
        %v498 = vunpack.c.l.b16 %v375
        %v499 = vunpack.c.h.b16 %v375
        %v500 = vunpack.c.l.b16 %v376
        %v501 = vunpack.c.h.b16 %v376
        %v502 = vunpack.c.l.b16 %v377
        %v503 = vunpack.c.h.b16 %v377
        %v504 = vunpack.c.l.b16 %v378
        %v505 = vunpack.c.h.b16 %v378
        %v506 = vunpack.c.l.b16 %v379
        %v507 = vunpack.c.h.b16 %v379
        %v508 = vpack.c.b16 %v446, %v444
        %v509 = vpack.c.b16 %v447, %v445
        %v510 = vpack.c.b16 %v450, %v448
        %v511 = vpack.c.b16 %v451, %v449
        %v512 = vpack.c.b16 %v454, %v452
        %v513 = vpack.c.b16 %v455, %v453
        %v514 = vpack.c.b16 %v458, %v456
        %v515 = vpack.c.b16 %v459, %v457
        %v516 = vpack.c.b16 %v462, %v460
        %v517 = vpack.c.b16 %v463, %v461
        %v518 = vpack.c.b16 %v466, %v464
        %v519 = vpack.c.b16 %v467, %v465
        %v520 = vpack.c.b16 %v470, %v468
        %v521 = vpack.c.b16 %v471, %v469
        %v522 = vpack.c.b16 %v474, %v472
        %v523 = vpack.c.b16 %v475, %v473
        %v524 = vpack.c.b16 %v478, %v476
        %v525 = vpack.c.b16 %v479, %v477
        %v526 = vpack.c.b16 %v482, %v480
        %v527 = vpack.c.b16 %v483, %v481
        %v528 = vpack.c.b16 %v486, %v484
        %v529 = vpack.c.b16 %v487, %v485
        %v530 = vpack.c.b16 %v490, %v488
        %v531 = vpack.c.b16 %v491, %v489
        %v532 = vpack.c.b16 %v494, %v492
        %v533 = vpack.c.b16 %v495, %v493
        %v534 = vpack.c.b16 %v498, %v496
        %v535 = vpack.c.b16 %v499, %v497
        %v536 = vpack.c.b16 %v502, %v500
        %v537 = vpack.c.b16 %v503, %v501
        %v538 = vpack.c.b16 %v506, %v504
        %v539 = vpack.c.b16 %v507, %v505
        %v604 = vunpack.c.l.b16 %v380
        %v605 = vunpack.c.l.b16 %v381
        %v606 = vunpack.c.l.b16 %v382
        %v607 = vunpack.c.l.b16 %v383
        %v608 = vunpack.c.l.b16 %v384
        %v609 = vunpack.c.l.b16 %v385
        %v610 = vunpack.c.l.b16 %v386
        %v611 = vunpack.c.l.b16 %v387
        %v612 = vunpack.c.l.b16 %v388
        %v613 = vunpack.c.l.b16 %v389
        %v614 = vunpack.c.l.b16 %v390
        %v615 = vunpack.c.l.b16 %v391
        %v616 = vunpack.c.l.b16 %v392
        %v617 = vunpack.c.l.b16 %v393
        %v618 = vunpack.c.l.b16 %v394
        %v619 = vunpack.c.l.b16 %v395
        %v620 = vunpack.c.l.b16 %v396
        %v621 = vunpack.c.l.b16 %v397
        %v622 = vunpack.c.l.b16 %v398
        %v623 = vunpack.c.l.b16 %v399
        %v624 = vunpack.c.l.b16 %v400
        %v625 = vunpack.c.l.b16 %v401
        %v626 = vunpack.c.l.b16 %v402
        %v627 = vunpack.c.l.b16 %v403
        %v628 = vunpack.c.l.b16 %v404
        %v629 = vunpack.c.l.b16 %v405
        %v630 = vunpack.c.l.b16 %v406
        %v631 = vunpack.c.l.b16 %v407
        %v632 = vunpack.c.l.b16 %v408
        %v633 = vunpack.c.l.b16 %v409
        %v634 = vunpack.c.l.b16 %v410
        %v635 = vunpack.c.l.b16 %v411
        %v636 = vpack.c.b16 %v605, %v604
        %v637 = vpack.c.b16 %v607, %v606
        %v638 = vpack.c.b16 %v609, %v608
        %v639 = vpack.c.b16 %v611, %v610
        %v640 = vpack.c.b16 %v613, %v612
        %v641 = vpack.c.b16 %v615, %v614
        %v642 = vpack.c.b16 %v617, %v616
        %v643 = vpack.c.b16 %v619, %v618
        %v644 = vpack.c.b16 %v621, %v620
        %v645 = vpack.c.b16 %v623, %v622
        %v646 = vpack.c.b16 %v625, %v624
        %v647 = vpack.c.b16 %v627, %v626
        %v648 = vpack.c.b16 %v629, %v628
        %v649 = vpack.c.b16 %v631, %v630
        %v650 = vpack.c.b16 %v633, %v632
        %v651 = vpack.c.b16 %v635, %v634
        %668 = vmatprep.subr.bf16.mxu0 0
        %669 = vmatpush1.bf16.msra.mxu0 %v643
        %670 = vmatprep.subr.bf16.mxu0 0
        %671 = vmatpush1.bf16.msra.mxu0 %v642
        %672 = vmatprep.subr.bf16.mxu0 0
        %673 = vmatpush1.bf16.msra.mxu0 %v641
        %674 = vmatprep.subr.bf16.mxu0 0
        %675 = vmatpush1.bf16.msra.mxu0 %v640
        %676 = vmatprep.subr.bf16.mxu0 0
        %677 = vmatpush1.bf16.msra.mxu0 %v639
        %678 = vmatprep.subr.bf16.mxu0 0
        %679 = vmatpush1.bf16.msra.mxu0 %v638
        %680 = vmatprep.subr.bf16.mxu0 0
        %681 = vmatpush1.bf16.msra.mxu0 %v637
        %682 = vmatprep.subr.bf16.mxu0 0
        %683 = vmatpush1.bf16.msra.mxu0 %v636
        %684 = vmatprep.subr.bf16.mxu0 0
        %685 = vmatpush2.bf16.msra.mxu0 %v651
        %686 = vmatprep.subr.bf16.mxu0 0
        %687 = vmatpush2.bf16.msra.mxu0 %v650
        %688 = vmatprep.subr.bf16.mxu0 0
        %689 = vmatpush2.bf16.msra.mxu0 %v649
        %690 = vmatprep.subr.bf16.mxu0 0
        %691 = vmatpush2.bf16.msra.mxu0 %v648
        %692 = vmatprep.subr.bf16.mxu0 0
        %693 = vmatpush2.bf16.msra.mxu0 %v647
        %694 = vmatprep.subr.bf16.mxu0 0
        %695 = vmatpush2.bf16.msra.mxu0 %v646
        %696 = vmatprep.subr.bf16.mxu0 0
        %697 = vmatpush2.bf16.msra.mxu0 %v645
        %698 = vmatprep.subr.bf16.mxu0 0
        %699 = vmatpush2.bf16.msra.mxu0 %v644
        %700 = vmatprep.mubr.bf16.mxu0 %v509
        %701 = vmatmul.mubr.bf16.gmra.mxu0 %v508
        %v702 = vpop.f32.mrf.mxu0
        %v703 = vadd.f32 0.0, %v702
        %v704 = vpop.f32.mrf.mxu0
        %v705 = vpop.f32.mrf.mxu0
        %v706 = vadd.f32 0.0, %v705
        %v707 = vpop.f32.mrf.mxu0
        %708 = vmatprep.mubr.bf16.mxu0 %v511
        %709 = vmatmul.mubr.bf16.gmra.mxu0 %v510
        %v710 = vpop.f32.mrf.mxu0
        %v711 = vadd.f32 0.0, %v710
        %v712 = vpop.f32.mrf.mxu0
        %v713 = vpop.f32.mrf.mxu0
        %v714 = vadd.f32 0.0, %v713
        %v715 = vpop.f32.mrf.mxu0
        %716 = vmatprep.mubr.bf16.mxu0 %v513
        %717 = vmatmul.mubr.bf16.gmra.mxu0 %v512
        %v718 = vpop.f32.mrf.mxu0
        %v719 = vadd.f32 0.0, %v718
        %v720 = vpop.f32.mrf.mxu0
        %v721 = vpop.f32.mrf.mxu0
        %v722 = vadd.f32 0.0, %v721
        %v723 = vpop.f32.mrf.mxu0
        %724 = vmatprep.mubr.bf16.mxu0 %v515
        %725 = vmatmul.mubr.bf16.gmra.mxu0 %v514
        %v726 = vpop.f32.mrf.mxu0
        %v727 = vadd.f32 0.0, %v726
        %v728 = vpop.f32.mrf.mxu0
        %v729 = vpop.f32.mrf.mxu0
        %v730 = vadd.f32 0.0, %v729
        %v731 = vpop.f32.mrf.mxu0
        %732 = vmatprep.mubr.bf16.mxu0 %v517
        %733 = vmatmul.mubr.bf16.gmra.mxu0 %v516
        %v734 = vpop.f32.mrf.mxu0
        %v735 = vadd.f32 0.0, %v734
        %v736 = vpop.f32.mrf.mxu0
        %v737 = vpop.f32.mrf.mxu0
        %v738 = vadd.f32 0.0, %v737
        %v739 = vpop.f32.mrf.mxu0
        %740 = vmatprep.mubr.bf16.mxu0 %v519
        %741 = vmatmul.mubr.bf16.gmra.mxu0 %v518
        %v742 = vpop.f32.mrf.mxu0
        %v743 = vadd.f32 0.0, %v742
        %v744 = vpop.f32.mrf.mxu0
        %v745 = vpop.f32.mrf.mxu0
        %v746 = vadd.f32 0.0, %v745
        %v747 = vpop.f32.mrf.mxu0
        %748 = vmatprep.mubr.bf16.mxu0 %v521
        %749 = vmatmul.mubr.bf16.gmra.mxu0 %v520
        %v750 = vpop.f32.mrf.mxu0
        %v751 = vadd.f32 0.0, %v750
        %v752 = vpop.f32.mrf.mxu0
        %v753 = vpop.f32.mrf.mxu0
        %v754 = vadd.f32 0.0, %v753
        %v755 = vpop.f32.mrf.mxu0
        %756 = vmatprep.mubr.bf16.mxu0 %v523
        %757 = vmatmul.mubr.bf16.gmra.mxu0 %v522
        %v758 = vpop.f32.mrf.mxu0
        %v759 = vadd.f32 0.0, %v758
        %v760 = vpop.f32.mrf.mxu0
        %v761 = vpop.f32.mrf.mxu0
        %v762 = vadd.f32 0.0, %v761
        %v763 = vpop.f32.mrf.mxu0
        %764 = vmatprep.mubr.bf16.mxu0 %v525
        %765 = vmatmul.mubr.bf16.gmra.mxu0 %v524
        %v766 = vpop.f32.mrf.mxu0
        %v767 = vadd.f32 0.0, %v766
        %v768 = vpop.f32.mrf.mxu0
        %v769 = vpop.f32.mrf.mxu0
        %v770 = vadd.f32 0.0, %v769
        %v771 = vpop.f32.mrf.mxu0
        %772 = vmatprep.mubr.bf16.mxu0 %v527
        %773 = vmatmul.mubr.bf16.gmra.mxu0 %v526
        %v774 = vpop.f32.mrf.mxu0
        %v775 = vadd.f32 0.0, %v774
        %v776 = vpop.f32.mrf.mxu0
        %v777 = vpop.f32.mrf.mxu0
        %v778 = vadd.f32 0.0, %v777
        %v779 = vpop.f32.mrf.mxu0
        %780 = vmatprep.mubr.bf16.mxu0 %v529
        %781 = vmatmul.mubr.bf16.gmra.mxu0 %v528
        %v782 = vpop.f32.mrf.mxu0
        %v783 = vadd.f32 0.0, %v782
        %v784 = vpop.f32.mrf.mxu0
        %v785 = vpop.f32.mrf.mxu0
        %v786 = vadd.f32 0.0, %v785
        %v787 = vpop.f32.mrf.mxu0
        %788 = vmatprep.mubr.bf16.mxu0 %v531
        %789 = vmatmul.mubr.bf16.gmra.mxu0 %v530
        %v790 = vpop.f32.mrf.mxu0
        %v791 = vadd.f32 0.0, %v790
        %v792 = vpop.f32.mrf.mxu0
        %v793 = vpop.f32.mrf.mxu0
        %v794 = vadd.f32 0.0, %v793
        %v795 = vpop.f32.mrf.mxu0
        %796 = vmatprep.mubr.bf16.mxu0 %v533
        %797 = vmatmul.mubr.bf16.gmra.mxu0 %v532
        %v798 = vpop.f32.mrf.mxu0
        %v799 = vadd.f32 0.0, %v798
        %v800 = vpop.f32.mrf.mxu0
        %v801 = vpop.f32.mrf.mxu0
        %v802 = vadd.f32 0.0, %v801
        %v803 = vpop.f32.mrf.mxu0
        %804 = vmatprep.mubr.bf16.mxu0 %v535
        %805 = vmatmul.mubr.bf16.gmra.mxu0 %v534
        %v806 = vpop.f32.mrf.mxu0
        %v807 = vadd.f32 0.0, %v806
        %v808 = vpop.f32.mrf.mxu0
        %v809 = vpop.f32.mrf.mxu0
        %v810 = vadd.f32 0.0, %v809
        %v811 = vpop.f32.mrf.mxu0
        %812 = vmatprep.mubr.bf16.mxu0 %v537
        %813 = vmatmul.mubr.bf16.gmra.mxu0 %v536
        %v814 = vpop.f32.mrf.mxu0
        %v815 = vadd.f32 0.0, %v814
        %v816 = vpop.f32.mrf.mxu0
        %v817 = vpop.f32.mrf.mxu0
        %v818 = vadd.f32 0.0, %v817
        %v819 = vpop.f32.mrf.mxu0
        %820 = vmatprep.mubr.bf16.mxu0 %v539
        %821 = vmatmul.mubr.bf16.gmra.mxu0 %v538
        %v822 = vpop.f32.mrf.mxu0
        %v823 = vadd.f32 0.0, %v822
        %v824 = vpop.f32.mrf.mxu0
        %v825 = vpop.f32.mrf.mxu0
        %v826 = vadd.f32 0.0, %v825
        %v827 = vpop.f32.mrf.mxu0
        %828 = vdwg.mxu0
        %v829 = vadd.f32 %v316, %v703
        %v830 = vadd.f32 %v317, %v706
        %v831 = vadd.f32 %v318, %v711
        %v832 = vadd.f32 %v319, %v714
        %v833 = vadd.f32 %v320, %v719
        %v834 = vadd.f32 %v321, %v722
        %v835 = vadd.f32 %v322, %v727
        %v836 = vadd.f32 %v323, %v730
        %v837 = vadd.f32 %v324, %v735
        %v838 = vadd.f32 %v325, %v738
        %v839 = vadd.f32 %v326, %v743
        %v840 = vadd.f32 %v327, %v746
        %v841 = vadd.f32 %v328, %v751
        %v842 = vadd.f32 %v329, %v754
        %v843 = vadd.f32 %v330, %v759
        %v844 = vadd.f32 %v331, %v762
        %v845 = vadd.f32 %v332, %v767
        %v846 = vadd.f32 %v333, %v770
        %v847 = vadd.f32 %v334, %v775
        %v848 = vadd.f32 %v335, %v778
        %v849 = vadd.f32 %v336, %v783
        %v850 = vadd.f32 %v337, %v786
        %v851 = vadd.f32 %v338, %v791
        %v852 = vadd.f32 %v339, %v794
        %v853 = vadd.f32 %v340, %v799
        %v854 = vadd.f32 %v341, %v802
        %v855 = vadd.f32 %v342, %v807
        %v856 = vadd.f32 %v343, %v810
        %v857 = vadd.f32 %v344, %v815
        %v858 = vadd.f32 %v345, %v818
        %v859 = vadd.f32 %v346, %v823
        %v860 = vadd.f32 %v347, %v826
        %vm861 = vcmask 523264
        %862 = vst.msk [vmem:[#allocation2] sm:$0xff] %vm861, %v829
        %863 = vst.msk [vmem:[#allocation2 + $0x8] sm:$0xff] %vm861, %v830
        %864 = vst.msk [vmem:[#allocation2 + $0x10] sm:$0xff] %vm861, %v831
        %865 = vst.msk [vmem:[#allocation2 + $0x18] sm:$0xff] %vm861, %v832
        %866 = vst.msk [vmem:[#allocation2 + $0x20] sm:$0xff] %vm861, %v833
        %867 = vst.msk [vmem:[#allocation2 + $0x28] sm:$0xff] %vm861, %v834
        %868 = vst.msk [vmem:[#allocation2 + $0x30] sm:$0xff] %vm861, %v835
        %869 = vst.msk [vmem:[#allocation2 + $0x38] sm:$0xff] %vm861, %v836
        %870 = vst.msk [vmem:[#allocation2 + $0x40] sm:$0xff] %vm861, %v837
        %871 = vst.msk [vmem:[#allocation2 + $0x48] sm:$0xff] %vm861, %v838
        %872 = vst.msk [vmem:[#allocation2 + $0x50] sm:$0xff] %vm861, %v839
        %873 = vst.msk [vmem:[#allocation2 + $0x58] sm:$0xff] %vm861, %v840
        %874 = vst.msk [vmem:[#allocation2 + $0x60] sm:$0xff] %vm861, %v841
        %875 = vst.msk [vmem:[#allocation2 + $0x68] sm:$0xff] %vm861, %v842
        %876 = vst.msk [vmem:[#allocation2 + $0x70] sm:$0xff] %vm861, %v843
        %877 = vst.msk [vmem:[#allocation2 + $0x78] sm:$0xff] %vm861, %v844
        %878 = vst.msk [vmem:[#allocation2 + $0x80] sm:$0xff] %vm861, %v845
        %879 = vst.msk [vmem:[#allocation2 + $0x88] sm:$0xff] %vm861, %v846
        %880 = vst.msk [vmem:[#allocation2 + $0x90] sm:$0xff] %vm861, %v847
        %881 = vst.msk [vmem:[#allocation2 + $0x98] sm:$0xff] %vm861, %v848
        %882 = vst.msk [vmem:[#allocation2 + $0xa0] sm:$0xff] %vm861, %v849
        %883 = vst.msk [vmem:[#allocation2 + $0xa8] sm:$0xff] %vm861, %v850
        %884 = vst.msk [vmem:[#allocation2 + $0xb0] sm:$0xff] %vm861, %v851
        %885 = vst.msk [vmem:[#allocation2 + $0xb8] sm:$0xff] %vm861, %v852
        %886 = vst.msk [vmem:[#allocation2 + $0xc0] sm:$0xff] %vm861, %v853
        %887 = vst.msk [vmem:[#allocation2 + $0xc8] sm:$0xff] %vm861, %v854
        %888 = vst.msk [vmem:[#allocation2 + $0xd0] sm:$0xff] %vm861, %v855
        %889 = vst.msk [vmem:[#allocation2 + $0xd8] sm:$0xff] %vm861, %v856
        %890 = vst.msk [vmem:[#allocation2 + $0xe0] sm:$0xff] %vm861, %v857
        %891 = vst.msk [vmem:[#allocation2 + $0xe8] sm:$0xff] %vm861, %v858
        %892 = vst.msk [vmem:[#allocation2 + $0xf0] sm:$0xff] %vm861, %v859
        %893 = vst.msk [vmem:[#allocation2 + $0xf8] sm:$0xff] %vm861, %v860
        %p894 = scmp.eq.s32.totalorder %s26, 0
        %p895 = pnand %p279, %p894
        %p896 = pneg %p895
        // Predicated region
        $region33: #{conv_matmul.1} parent=27 // pred_check
          _
        $region34: #{conv_matmul.1} parent=27 // pred_check_branch
          %898 = sbr.rel (%p895) target = $region36
        $region35: #{conv_matmul.1} parent=27 // pred_region
          %vm899 = vcmask 516096
          %900 = vst.msk [vmem:[#allocation3] sm:$0x1] %vm899, 0.0
          %901 = vst.msk [vmem:[#allocation4] sm:$0x1] %vm899, 0.0
        $region36: #{conv_matmul.1} parent=27 // pred_fallthru
          _
        // Predicated region
        $region37: #{conv_matmul.1} parent=27 // pred_check
          %p902 = pneg %p279
        $region38: #{conv_matmul.1} parent=27 // pred_check_branch
          %904 = sbr.rel (%p902) target = $region40
        $region39: #{conv_matmul.1} parent=27 // pred_region
          %v905 = vld [vmem:[#allocation2] sm:$0xff]
          %v906 = vld [vmem:[#allocation2 + $0x8] sm:$0xff]
          %v907 = vld [vmem:[#allocation2 + $0x10] sm:$0xff]
          %v908 = vld [vmem:[#allocation2 + $0x18] sm:$0xff]
          %v909 = vld [vmem:[#allocation2 + $0x20] sm:$0xff]
          %v910 = vld [vmem:[#allocation2 + $0x28] sm:$0xff]
          %v911 = vld [vmem:[#allocation2 + $0x30] sm:$0xff]
          %v912 = vld [vmem:[#allocation2 + $0x38] sm:$0xff]
          %v913 = vld [vmem:[#allocation2 + $0x40] sm:$0xff]
          %v914 = vld [vmem:[#allocation2 + $0x48] sm:$0xff]
          %v915 = vld [vmem:[#allocation2 + $0x50] sm:$0xff]
          %v916 = vld [vmem:[#allocation2 + $0x58] sm:$0xff]
          %v917 = vld [vmem:[#allocation2 + $0x60] sm:$0xff]
          %v918 = vld [vmem:[#allocation2 + $0x68] sm:$0xff]
          %v919 = vld [vmem:[#allocation2 + $0x70] sm:$0xff]
          %v920 = vld [vmem:[#allocation2 + $0x78] sm:$0xff]
          %v921 = vld [vmem:[#allocation2 + $0x80] sm:$0xff]
          %v922 = vld [vmem:[#allocation2 + $0x88] sm:$0xff]
          %v923 = vld [vmem:[#allocation2 + $0x90] sm:$0xff]
          %v924 = vld [vmem:[#allocation2 + $0x98] sm:$0xff]
          %v925 = vld [vmem:[#allocation2 + $0xa0] sm:$0xff]
          %v926 = vld [vmem:[#allocation2 + $0xa8] sm:$0xff]
          %v927 = vld [vmem:[#allocation2 + $0xb0] sm:$0xff]
          %v928 = vld [vmem:[#allocation2 + $0xb8] sm:$0xff]
          %v929 = vld [vmem:[#allocation2 + $0xc0] sm:$0xff]
          %v930 = vld [vmem:[#allocation2 + $0xc8] sm:$0xff]
          %v931 = vld [vmem:[#allocation2 + $0xd0] sm:$0xff]
          %v932 = vld [vmem:[#allocation2 + $0xd8] sm:$0xff]
          %v933 = vld [vmem:[#allocation2 + $0xe0] sm:$0xff]
          %v934 = vld [vmem:[#allocation2 + $0xe8] sm:$0xff]
          %v935 = vld [vmem:[#allocation2 + $0xf0] sm:$0xff]
          %v936 = vld [vmem:[#allocation2 + $0xf8] sm:$0xff]
          %v937 = vpack.c.bf16 %v906, %v905
          %v938 = vpack.c.bf16 %v908, %v907
          %v939 = vpack.c.bf16 %v910, %v909
          %v940 = vpack.c.bf16 %v912, %v911
          %v941 = vpack.c.bf16 %v914, %v913
          %v942 = vpack.c.bf16 %v916, %v915
          %v943 = vpack.c.bf16 %v918, %v917
          %v944 = vpack.c.bf16 %v920, %v919
          %v945 = vpack.c.bf16 %v922, %v921
          %v946 = vpack.c.bf16 %v924, %v923
          %v947 = vpack.c.bf16 %v926, %v925
          %v948 = vpack.c.bf16 %v928, %v927
          %v949 = vpack.c.bf16 %v930, %v929
          %v950 = vpack.c.bf16 %v932, %v931
          %v951 = vpack.c.bf16 %v934, %v933
          %v952 = vpack.c.bf16 %v936, %v935
          %v969 = vunpack.c.l.b16 %v937
          %v970 = vunpack.c.h.b16 %v937
          %v971 = vunpack.c.l.b16 %v938
          %v972 = vunpack.c.h.b16 %v938
          %v973 = vunpack.c.l.b16 %v939
          %v974 = vunpack.c.h.b16 %v939
          %v975 = vunpack.c.l.b16 %v940
          %v976 = vunpack.c.h.b16 %v940
          %v977 = vunpack.c.l.b16 %v941
          %v978 = vunpack.c.h.b16 %v941
          %v979 = vunpack.c.l.b16 %v942
          %v980 = vunpack.c.h.b16 %v942
          %v981 = vunpack.c.l.b16 %v943
          %v982 = vunpack.c.h.b16 %v943
          %v983 = vunpack.c.l.b16 %v944
          %v984 = vunpack.c.h.b16 %v944
          %v985 = vunpack.c.l.b16 %v945
          %v986 = vunpack.c.h.b16 %v945
          %v987 = vunpack.c.l.b16 %v946
          %v988 = vunpack.c.h.b16 %v946
          %v989 = vunpack.c.l.b16 %v947
          %v990 = vunpack.c.h.b16 %v947
          %v991 = vunpack.c.l.b16 %v948
          %v992 = vunpack.c.h.b16 %v948
          %v993 = vunpack.c.l.b16 %v949
          %v994 = vunpack.c.h.b16 %v949
          %v995 = vunpack.c.l.b16 %v950
          %v996 = vunpack.c.h.b16 %v950
          %v997 = vunpack.c.l.b16 %v951
          %v998 = vunpack.c.h.b16 %v951
          %v999 = vunpack.c.l.b16 %v952
          %v1000 = vunpack.c.h.b16 %v952
          %v1001 = vpack.c.b16 %v969, %v969
          %v1002 = vpack.c.b16 %v970, %v970
          %v1003 = vpack.c.b16 %v971, %v971
          %v1004 = vpack.c.b16 %v972, %v972
          %v1005 = vpack.c.b16 %v973, %v973
          %v1006 = vpack.c.b16 %v974, %v974
          %v1007 = vpack.c.b16 %v975, %v975
          %v1008 = vpack.c.b16 %v976, %v976
          %v1009 = vpack.c.b16 %v977, %v977
          %v1010 = vpack.c.b16 %v978, %v978
          %v1011 = vpack.c.b16 %v979, %v979
          %v1012 = vpack.c.b16 %v980, %v980
          %v1013 = vpack.c.b16 %v981, %v981
          %v1014 = vpack.c.b16 %v982, %v982
          %v1015 = vpack.c.b16 %v983, %v983
          %v1016 = vpack.c.b16 %v984, %v984
          %v1017 = vpack.c.b16 %v985, %v985
          %v1018 = vpack.c.b16 %v986, %v986
          %v1019 = vpack.c.b16 %v987, %v987
          %v1020 = vpack.c.b16 %v988, %v988
          %v1021 = vpack.c.b16 %v989, %v989
          %v1022 = vpack.c.b16 %v990, %v990
          %v1023 = vpack.c.b16 %v991, %v991
          %v1024 = vpack.c.b16 %v992, %v992
          %v1025 = vpack.c.b16 %v993, %v993
          %v1026 = vpack.c.b16 %v994, %v994
          %v1027 = vpack.c.b16 %v995, %v995
          %v1028 = vpack.c.b16 %v996, %v996
          %v1029 = vpack.c.b16 %v997, %v997
          %v1030 = vpack.c.b16 %v998, %v998
          %v1031 = vpack.c.b16 %v999, %v999
          %v1032 = vpack.c.b16 %v1000, %v1000
          %vm1065 = vcmask 519168
          %1066 = vst.msk [vmem:[%s251] sm:$0xf] %vm1065, %v1001
          %1067 = vst.msk [vmem:[%s251 + $0x4] sm:$0xf] %vm1065, %v1002
          %1068 = vst.msk [vmem:[%s251 + $0x8] sm:$0xf] %vm1065, %v1003
          %1069 = vst.msk [vmem:[%s251 + $0xc] sm:$0xf] %vm1065, %v1004
          %1070 = vst.msk [vmem:[%s251 + $0x10] sm:$0xf] %vm1065, %v1005
          %1071 = vst.msk [vmem:[%s251 + $0x14] sm:$0xf] %vm1065, %v1006
          %1072 = vst.msk [vmem:[%s251 + $0x18] sm:$0xf] %vm1065, %v1007
          %1073 = vst.msk [vmem:[%s251 + $0x1c] sm:$0xf] %vm1065, %v1008
          %1074 = vst.msk [vmem:[%s251 + $0x20] sm:$0xf] %vm1065, %v1009
          %1075 = vst.msk [vmem:[%s251 + $0x24] sm:$0xf] %vm1065, %v1010
          %1076 = vst.msk [vmem:[%s251 + $0x28] sm:$0xf] %vm1065, %v1011
          %1077 = vst.msk [vmem:[%s251 + $0x2c] sm:$0xf] %vm1065, %v1012
          %1078 = vst.msk [vmem:[%s251 + $0x30] sm:$0xf] %vm1065, %v1013
          %1079 = vst.msk [vmem:[%s251 + $0x34] sm:$0xf] %vm1065, %v1014
          %1080 = vst.msk [vmem:[%s251 + $0x38] sm:$0xf] %vm1065, %v1015
          %1081 = vst.msk [vmem:[%s251 + $0x3c] sm:$0xf] %vm1065, %v1016
          %1082 = vst.msk [vmem:[%s251 + $0x40] sm:$0xf] %vm1065, %v1017
          %1083 = vst.msk [vmem:[%s251 + $0x44] sm:$0xf] %vm1065, %v1018
          %1084 = vst.msk [vmem:[%s251 + $0x48] sm:$0xf] %vm1065, %v1019
          %1085 = vst.msk [vmem:[%s251 + $0x4c] sm:$0xf] %vm1065, %v1020
          %1086 = vst.msk [vmem:[%s251 + $0x50] sm:$0xf] %vm1065, %v1021
          %1087 = vst.msk [vmem:[%s251 + $0x54] sm:$0xf] %vm1065, %v1022
          %1088 = vst.msk [vmem:[%s251 + $0x58] sm:$0xf] %vm1065, %v1023
          %1089 = vst.msk [vmem:[%s251 + $0x5c] sm:$0xf] %vm1065, %v1024
          %1090 = vst.msk [vmem:[%s251 + $0x60] sm:$0xf] %vm1065, %v1025
          %1091 = vst.msk [vmem:[%s251 + $0x64] sm:$0xf] %vm1065, %v1026
          %1092 = vst.msk [vmem:[%s251 + $0x68] sm:$0xf] %vm1065, %v1027
          %1093 = vst.msk [vmem:[%s251 + $0x6c] sm:$0xf] %vm1065, %v1028
          %1094 = vst.msk [vmem:[%s251 + $0x70] sm:$0xf] %vm1065, %v1029
          %1095 = vst.msk [vmem:[%s251 + $0x74] sm:$0xf] %vm1065, %v1030
          %1096 = vst.msk [vmem:[%s251 + $0x78] sm:$0xf] %vm1065, %v1031
          %1097 = vst.msk [vmem:[%s251 + $0x7c] sm:$0xf] %vm1065, %v1032
          %v1098 = vld [vmem:[#allocation3] sm:$0x1]
          %v1099 = vsel %vm861, %v905, 0.0
          %v1100 = vsel %vm861, %v906, 0.0
          %v1101 = vadd.f32 %v1099, %v1100
          %v1102 = vsel %vm861, %v907, 0.0
          %v1103 = vadd.f32 %v1101, %v1102
          %v1104 = vsel %vm861, %v908, 0.0
          %v1105 = vadd.f32 %v1103, %v1104
          %v1106 = vsel %vm861, %v909, 0.0
          %v1107 = vadd.f32 %v1105, %v1106
          %v1108 = vsel %vm861, %v910, 0.0
          %v1109 = vadd.f32 %v1107, %v1108
          %v1110 = vsel %vm861, %v911, 0.0
          %v1111 = vadd.f32 %v1109, %v1110
          %v1112 = vsel %vm861, %v912, 0.0
          %v1113 = vadd.f32 %v1111, %v1112
          %v1114 = vsel %vm861, %v913, 0.0
          %v1115 = vadd.f32 %v1113, %v1114
          %v1116 = vsel %vm861, %v914, 0.0
          %v1117 = vadd.f32 %v1115, %v1116
          %v1118 = vsel %vm861, %v915, 0.0
          %v1119 = vadd.f32 %v1117, %v1118
          %v1120 = vsel %vm861, %v916, 0.0
          %v1121 = vadd.f32 %v1119, %v1120
          %v1122 = vsel %vm861, %v917, 0.0
          %v1123 = vadd.f32 %v1121, %v1122
          %v1124 = vsel %vm861, %v918, 0.0
          %v1125 = vadd.f32 %v1123, %v1124
          %v1126 = vsel %vm861, %v919, 0.0
          %v1127 = vadd.f32 %v1125, %v1126
          %v1128 = vsel %vm861, %v920, 0.0
          %v1129 = vadd.f32 %v1127, %v1128
          %v1130 = vsel %vm861, %v921, 0.0
          %v1131 = vadd.f32 %v1129, %v1130
          %v1132 = vsel %vm861, %v922, 0.0
          %v1133 = vadd.f32 %v1131, %v1132
          %v1134 = vsel %vm861, %v923, 0.0
          %v1135 = vadd.f32 %v1133, %v1134
          %v1136 = vsel %vm861, %v924, 0.0
          %v1137 = vadd.f32 %v1135, %v1136
          %v1138 = vsel %vm861, %v925, 0.0
          %v1139 = vadd.f32 %v1137, %v1138
          %v1140 = vsel %vm861, %v926, 0.0
          %v1141 = vadd.f32 %v1139, %v1140
          %v1142 = vsel %vm861, %v927, 0.0
          %v1143 = vadd.f32 %v1141, %v1142
          %v1144 = vsel %vm861, %v928, 0.0
          %v1145 = vadd.f32 %v1143, %v1144
          %v1146 = vsel %vm861, %v929, 0.0
          %v1147 = vadd.f32 %v1145, %v1146
          %v1148 = vsel %vm861, %v930, 0.0
          %v1149 = vadd.f32 %v1147, %v1148
          %v1150 = vsel %vm861, %v931, 0.0
          %v1151 = vadd.f32 %v1149, %v1150
          %v1152 = vsel %vm861, %v932, 0.0
          %v1153 = vadd.f32 %v1151, %v1152
          %v1154 = vsel %vm861, %v933, 0.0
          %v1155 = vadd.f32 %v1153, %v1154
          %v1156 = vsel %vm861, %v934, 0.0
          %v1157 = vadd.f32 %v1155, %v1156
          %v1158 = vsel %vm861, %v935, 0.0
          %v1159 = vadd.f32 %v1157, %v1158
          %v1160 = vsel %vm861, %v936, 0.0
          %v1161 = vadd.f32 %v1159, %v1160
          %v1162 = vrot.slane %v1161, 4
          %v1163 = vadd.f32 %v1161, %v1162
          %v1164 = vrot.slane %v1163, 2
          %v1165 = vadd.f32 %v1163, %v1164
          %v1166 = vrot.slane %v1165, 1
          %v1167 = vadd.f32 %v1165, %v1166
          %v1168 = vadd.f32 %v1098, %v1167
          %vm1169 = vcmask 516096
          %1170 = vst.msk [vmem:[#allocation3] sm:$0x1] %vm1169, %v1168
          %v1171 = vld [vmem:[#allocation4] sm:$0x1]
          %v1172 = vmul.f32 %v905, %v905
          %v1173 = vmul.f32 %v906, %v906
          %v1174 = vmul.f32 %v907, %v907
          %v1175 = vmul.f32 %v908, %v908
          %v1176 = vmul.f32 %v909, %v909
          %v1177 = vmul.f32 %v910, %v910
          %v1178 = vmul.f32 %v911, %v911
          %v1179 = vmul.f32 %v912, %v912
          %v1180 = vmul.f32 %v913, %v913
          %v1181 = vmul.f32 %v914, %v914
          %v1182 = vmul.f32 %v915, %v915
          %v1183 = vmul.f32 %v916, %v916
          %v1184 = vmul.f32 %v917, %v917
          %v1185 = vmul.f32 %v918, %v918
          %v1186 = vmul.f32 %v919, %v919
          %v1187 = vmul.f32 %v920, %v920
          %v1188 = vmul.f32 %v921, %v921
          %v1189 = vmul.f32 %v922, %v922
          %v1190 = vmul.f32 %v923, %v923
          %v1191 = vmul.f32 %v924, %v924
          %v1192 = vmul.f32 %v925, %v925
          %v1193 = vmul.f32 %v926, %v926
          %v1194 = vmul.f32 %v927, %v927
          %v1195 = vmul.f32 %v928, %v928
          %v1196 = vmul.f32 %v929, %v929
          %v1197 = vmul.f32 %v930, %v930
          %v1198 = vmul.f32 %v931, %v931
          %v1199 = vmul.f32 %v932, %v932
          %v1200 = vmul.f32 %v933, %v933
          %v1201 = vmul.f32 %v934, %v934
          %v1202 = vmul.f32 %v935, %v935
          %v1203 = vmul.f32 %v936, %v936
          %v1204 = vsel %vm861, %v1172, 0.0
          %v1205 = vsel %vm861, %v1173, 0.0
          %v1206 = vadd.f32 %v1204, %v1205
          %v1207 = vsel %vm861, %v1174, 0.0
          %v1208 = vadd.f32 %v1206, %v1207
          %v1209 = vsel %vm861, %v1175, 0.0
          %v1210 = vadd.f32 %v1208, %v1209
          %v1211 = vsel %vm861, %v1176, 0.0
          %v1212 = vadd.f32 %v1210, %v1211
          %v1213 = vsel %vm861, %v1177, 0.0
          %v1214 = vadd.f32 %v1212, %v1213
          %v1215 = vsel %vm861, %v1178, 0.0
          %v1216 = vadd.f32 %v1214, %v1215
          %v1217 = vsel %vm861, %v1179, 0.0
          %v1218 = vadd.f32 %v1216, %v1217
          %v1219 = vsel %vm861, %v1180, 0.0
          %v1220 = vadd.f32 %v1218, %v1219
          %v1221 = vsel %vm861, %v1181, 0.0
          %v1222 = vadd.f32 %v1220, %v1221
          %v1223 = vsel %vm861, %v1182, 0.0
          %v1224 = vadd.f32 %v1222, %v1223
          %v1225 = vsel %vm861, %v1183, 0.0
          %v1226 = vadd.f32 %v1224, %v1225
          %v1227 = vsel %vm861, %v1184, 0.0
          %v1228 = vadd.f32 %v1226, %v1227
          %v1229 = vsel %vm861, %v1185, 0.0
          %v1230 = vadd.f32 %v1228, %v1229
          %v1231 = vsel %vm861, %v1186, 0.0
          %v1232 = vadd.f32 %v1230, %v1231
          %v1233 = vsel %vm861, %v1187, 0.0
          %v1234 = vadd.f32 %v1232, %v1233
          %v1235 = vsel %vm861, %v1188, 0.0
          %v1236 = vadd.f32 %v1234, %v1235
          %v1237 = vsel %vm861, %v1189, 0.0
          %v1238 = vadd.f32 %v1236, %v1237
          %v1239 = vsel %vm861, %v1190, 0.0
          %v1240 = vadd.f32 %v1238, %v1239
          %v1241 = vsel %vm861, %v1191, 0.0
          %v1242 = vadd.f32 %v1240, %v1241
          %v1243 = vsel %vm861, %v1192, 0.0
          %v1244 = vadd.f32 %v1242, %v1243
          %v1245 = vsel %vm861, %v1193, 0.0
          %v1246 = vadd.f32 %v1244, %v1245
          %v1247 = vsel %vm861, %v1194, 0.0
          %v1248 = vadd.f32 %v1246, %v1247
          %v1249 = vsel %vm861, %v1195, 0.0
          %v1250 = vadd.f32 %v1248, %v1249
          %v1251 = vsel %vm861, %v1196, 0.0
          %v1252 = vadd.f32 %v1250, %v1251
          %v1253 = vsel %vm861, %v1197, 0.0
          %v1254 = vadd.f32 %v1252, %v1253
          %v1255 = vsel %vm861, %v1198, 0.0
          %v1256 = vadd.f32 %v1254, %v1255
          %v1257 = vsel %vm861, %v1199, 0.0
          %v1258 = vadd.f32 %v1256, %v1257
          %v1259 = vsel %vm861, %v1200, 0.0
          %v1260 = vadd.f32 %v1258, %v1259
          %v1261 = vsel %vm861, %v1201, 0.0
          %v1262 = vadd.f32 %v1260, %v1261
          %v1263 = vsel %vm861, %v1202, 0.0
          %v1264 = vadd.f32 %v1262, %v1263
          %v1265 = vsel %vm861, %v1203, 0.0
          %v1266 = vadd.f32 %v1264, %v1265
          %v1267 = vrot.slane %v1266, 4
          %v1268 = vadd.f32 %v1266, %v1267
          %v1269 = vrot.slane %v1268, 2
          %v1270 = vadd.f32 %v1268, %v1269
          %v1271 = vrot.slane %v1270, 1
          %v1272 = vadd.f32 %v1270, %v1271
          %v1273 = vadd.f32 %v1171, %v1272
          %1274 = vst.msk [vmem:[#allocation4] sm:$0x1] %vm1169, %v1273
        $region40: #{conv_matmul.1} parent=27 // pred_fallthru
          _
        %p1275 = scmp.eq.s32.totalorder %s26, 1
        %p1276 = pnand %p279, %p1275
        %p1277 = pneg %p1276
        // Predicated region
        $region41: #{conv_matmul.1} parent=27 // pred_check
          _
        $region42: #{conv_matmul.1} parent=27 // pred_check_branch
          %1279 = sbr.rel (%p1276) target = $region44
        $region43: #{conv_matmul.1} parent=27 // pred_region
          %v1280 = vld [vmem:[#allocation3] sm:$0x1]
          %vm1281 = vcmask 516096
          %1282 = vst.msk [vmem:[#allocation7] sm:$0x1] %vm1281, %v1280
          %v1283 = vld [vmem:[#allocation4] sm:$0x1]
          %1284 = vst.msk [vmem:[#allocation9] sm:$0x1] %vm1281, %v1283
        $region44: #{conv_matmul.1} parent=27 // pred_fallthru
          _
        %s1285 = sand.u32 %s105, 1
        %s1286 = scalar_lea.sflag [#allocation6], %s1285
        %s1287 = sand.u32 %s105, 1
        %s1288 = smul.addr %s1287, 128
        %s1289 = scalar_lea.vmem [#allocation5], %s1288
        // Predicated region
        $region45: #{conv_matmul.1} parent=27 // pred_check
          %p1290 = pneg %p115
        $region46: #{conv_matmul.1} parent=27 // pred_check_branch
          %1292 = sbr.rel (%p1290) target = $region48
        $region47: #{conv_matmul.1} parent=27 // pred_region
          %s1293 = smul.u32 32, %s26
          %s1295 = ssub.s32 2048, 2048
          %1296 = vsyncadd %s1286, %s1295
          %s1297 = sadd.s32 %s25, %s1293
          %s1298 = smul.addr %s1297, 64
          %s1299 = scalar_lea.hbm %s2, %s1298
          %s1300 = sshll.u32 %s1289, 4
          %s1301 = int_to_ptr.vmem [resolvable:$true] %s1300
          %1306 = dma.vmem_to_hbm [thread:$0]  %s1301, 2048, %s1299, %s1286, 64, 64, 4
        $region48: #{conv_matmul.1} parent=27 // pred_fallthru
          _
        // Predicated region
        $region49: #{conv_matmul.1} parent=27 // pred_check
          %p1307 = pneg %p141
        $region50: #{conv_matmul.1} parent=27 // pred_check_branch
          %1309 = sbr.rel (%p1307) target = $region52
        $region51: #{conv_matmul.1} parent=27 // pred_region
          %s1311 = ssub.s32 16, 16
          %1312 = vsyncadd [#allocation8], %s1311
          %s1313 = smul.addr %s25, 16
          %s1314 = scalar_lea.hbm %s3, %s1313
          %s1316 = sshll.u32 [#allocation7], 4
          %s1317 = int_to_ptr.vmem [resolvable:$true] %s1316
          %1319 = dma.vmem_to_hbm [thread:$0]  %s1317, 16, %s1314, [#allocation8]
        $region52: #{conv_matmul.1} parent=27 // pred_fallthru
          _
        // Predicated region
        $region53: #{conv_matmul.1} parent=27 // pred_check
          %p1320 = pneg %p167
        $region54: #{conv_matmul.1} parent=27 // pred_check_branch
          %1322 = sbr.rel (%p1320) target = $region56
        $region55: #{conv_matmul.1} parent=27 // pred_region
          %s1324 = ssub.s32 16, 16
          %1325 = vsyncadd [#allocation8], %s1324
          %s1326 = smul.addr %s25, 16
          %s1327 = scalar_lea.hbm %s4, %s1326
          %s1329 = sshll.u32 [#allocation9], 4
          %s1330 = int_to_ptr.vmem [resolvable:$true] %s1329
          %1332 = dma.vmem_to_hbm [thread:$0]  %s1330, 16, %s1327, [#allocation8]
        $region56: #{conv_matmul.1} parent=27 // pred_fallthru
          _
        // Predicated region
        $region57: #{conv_matmul.1} parent=27 // pred_check
          %p1333 = pneg %p141
        $region58: #{conv_matmul.1} parent=27 // pred_check_branch
          %1335 = sbr.rel (%p1333) target = $region60
        $region59: #{conv_matmul.1} parent=27 // pred_region
          %1336 = dma.done [#allocation8], 16
        $region60: #{conv_matmul.1} parent=27 // pred_fallthru
          _
        // Predicated region
        $region61: #{conv_matmul.1} parent=27 // pred_check
          %p1337 = pneg %p167
        $region62: #{conv_matmul.1} parent=27 // pred_check_branch
          %1339 = sbr.rel (%p1337) target = $region64
        $region63: #{conv_matmul.1} parent=27 // pred_region
          %1340 = dma.done [#allocation8], 16
        $region64: #{conv_matmul.1} parent=27 // pred_fallthru
          _
      $region28: #{conv_matmul.1} parent=5 // pred_fallthru
        _
      %p1341 = scmp.le.s32.totalorder 2, %s15
      // Predicated region
      $region65: #{conv_matmul.1} parent=5 // pred_check
        %p1342 = pneg %p1341
      $region66: #{conv_matmul.1} parent=5 // pred_check_branch
        %1344 = sbr.rel (%p1342) target = $region68
      $region67: #{conv_matmul.1} parent=5 // pred_region
        %s1345 = ssub.s32 %s15, 2
        // Predicated region
        $region69: #{conv_matmul.1} parent=67 // pred_check
          %p1346 = pneg %p121
        $region70: #{conv_matmul.1} parent=67 // pred_check_branch
          %1348 = sbr.rel (%p1346) target = $region72
        $region71: #{conv_matmul.1} parent=67 // pred_region
          %s1349 = sand.u32 %s106, 1
          %s1350 = scalar_lea.sflag [#allocation6], %s1349
          %s1351 = sand.u32 %s106, 1
          %s1352 = smul.addr %s1351, 128
          %s1353 = scalar_lea.vmem [#allocation5], %s1352
          %1354 = dma.done %s1350, 2048
        $region72: #{conv_matmul.1} parent=67 // pred_fallthru
          _
      $region68: #{conv_matmul.1} parent=5 // pred_fallthru
        _
    $region6: #{conv_matmul.1} parent=1 // loop_footer
      %s19 = sadd.s32 1, %s15
    $region7: #{conv_matmul.1} parent=1 // loop_footer_branch
      %14 = sbr.rel target = $region3
    $region8: #{conv_matmul.1} parent=1 // loop_exit
      _
    %1355 = vsyncpa [#allocation6], 1
    %s1356 = scalar_lea.sflag [#allocation6], 1
    %1357 = vsyncpa %s1356, 1
    %1358 = vsyncpa [#allocation8], 1

</llo_original>
